<compile_context>
chip_gen: v6e
topology: v6e:2x2x1
jax: 0.10.0
libtpu: 0.0.40
codegen_flags: <defaults>
</compile_context>

<pallas_src>
import functools
import math

import jax
import jax.numpy as jnp
from jax.experimental import pallas as pl
from jax.experimental.pallas import tpu as pltpu


# ----------------------------- kernel bodies ------------------------------


def _attention_core(Q, K, V, wo, bo, o_ref, *, num_heads, d_k, batch_block,
                    seq_len, compute_dtype):
    """Shared attention math for one batch block.  Q/K/V: (Bb*S, D), f32."""
    Bb, S, H, dk = batch_block, seq_len, num_heads, d_k
    D = H * dk
    R = Bb * S
    inv_sqrt_dk = 1.0 / math.sqrt(dk)

    # Head split: (R, D) -> (Bb*H, S, dk).  Heads land on the leading (batch)
    # axis of one batched matmul; dk stays the lane-contiguous minor dim.
    def split_heads(x):
        if Bb == 1:
            return jnp.swapaxes(x.reshape(S, H, dk), 0, 1)
        return jnp.swapaxes(x.reshape(Bb, S, H, dk), 1, 2).reshape(Bb * H, S, dk)

    def merge_heads(x):  # (Bb*H, S, dk) -> (R, D)
        if Bb == 1:
            return jnp.swapaxes(x, 0, 1).reshape(S, D)
        return jnp.swapaxes(x.reshape(Bb, H, S, dk), 1, 2).reshape(R, D)

    Qh = split_heads(Q).astype(compute_dtype)
    Kh = split_heads(K).astype(compute_dtype)
    Vh = split_heads(V).astype(compute_dtype)

    # All heads in one batched matmul; contraction over dk of BOTH operands
    # (dot_general form) -> no explicit K transpose on the XLU.
    scores = jnp.einsum("gqd,gkd->gqk", Qh, Kh,
                        preferred_element_type=jnp.float32) * inv_sqrt_dk

    # Numerically-stable softmax, kept in f32.  Division goes through the EUP
    # approximate reciprocal (separate VLIW slot from the VPU multiplies).
    scores = scores - jnp.max(scores, axis=-1, keepdims=True)
    p = jnp.exp(scores)
    p = p * pl.reciprocal(jnp.sum(p, axis=-1, keepdims=True), approx=True)

    ctx = jnp.einsum("gqk,gkd->gqd", p.astype(compute_dtype), Vh,
                     preferred_element_type=jnp.float32)
    ctx = merge_heads(ctx)                                    # (R, D)

    out = jnp.dot(ctx.astype(compute_dtype), wo,
                  preferred_element_type=jnp.float32) + bo    # (R, D)
    o_ref[...] = out.reshape(Bb, S, D).astype(o_ref.dtype)


def _mha_self_kernel(x_ref, wqkv_ref, bqkv_ref, wo_ref, bo_ref, o_ref, *,
                     num_heads, d_k, batch_block, seq_len, compute_dtype):
    """Self-attention path: fused QKV projection, one (R, D) @ (D, 3D) matmul."""
    D = num_heads * d_k
    R = batch_block * seq_len
    x = x_ref[...].reshape(R, D)
    qkv = jnp.dot(x, wqkv_ref[...],
                  preferred_element_type=jnp.float32) + bqkv_ref[...]
    Q = qkv[:, 0:D]
    K = qkv[:, D:2 * D]
    V = qkv[:, 2 * D:3 * D]
    _attention_core(Q, K, V, wo_ref[...], bo_ref[...], o_ref,
                    num_heads=num_heads, d_k=d_k, batch_block=batch_block,
                    seq_len=seq_len, compute_dtype=compute_dtype)


def _mha_cross_kernel(q_ref, k_ref, v_ref,
                      wq_ref, bq_ref, wk_ref, bk_ref, wv_ref, bv_ref,
                      wo_ref, bo_ref, o_ref, *,
                      num_heads, d_k, batch_block, seq_len, compute_dtype):
    """General path (q, k, v distinct): three fat row-batched projection matmuls."""
    D = num_heads * d_k
    R = batch_block * seq_len
    q = q_ref[...].reshape(R, D)
    k = k_ref[...].reshape(R, D)
    v = v_ref[...].reshape(R, D)
    Q = jnp.dot(q, wq_ref[...], preferred_element_type=jnp.float32) + bq_ref[...]
    K = jnp.dot(k, wk_ref[...], preferred_element_type=jnp.float32) + bk_ref[...]
    V = jnp.dot(v, wv_ref[...], preferred_element_type=jnp.float32) + bv_ref[...]
    _attention_core(Q, K, V, wo_ref[...], bo_ref[...], o_ref,
                    num_heads=num_heads, d_k=d_k, batch_block=batch_block,
                    seq_len=seq_len, compute_dtype=compute_dtype)


# ------------------------------ host wrapper ------------------------------


def _pick_batch_block(B, S, min_rows=128):
    """Batch elements per grid step: fill the MXU M-dim (>= min_rows rows) while
    keeping >= 2 parallel grid steps when possible (v7x megacore: 2 TensorCores)."""
    divisors = [d for d in range(1, B + 1) if B % d == 0]
    for d in divisors:
        if d * S >= min_rows and B // d >= 2:
            return d
    for d in divisors:
        if d * S >= min_rows:
            return d
    for d in reversed(divisors):
        if B // d >= 2:
            return d
    return B


def _vmem_limit_bytes(Bb, S, D, H, n_stream_inputs, itemsize):
    """Generous VMEM budget: double-buffered I/O blocks + weights + f32 intermediates
    (lane-padded), x2 headroom, clamped to the v7x-safe 64 MiB ceiling."""
    pad = lambda n: -(-n // 128) * 128          # minor dim padded to lane width
    rows = Bb * S
    blk_in = rows * pad(D) * itemsize
    blk_out = rows * pad(D) * 4
    weights = (4 * D * pad(D) + 4 * pad(3 * D)) * 4
    interm = (10 * rows * pad(D) + 2 * Bb * H * S * pad(S)) * 4
    est = 2 * (2 * (n_stream_inputs * blk_in + blk_out) + 2 * weights + interm)
    return int(min(max(est, 16 * 1024 * 1024), 64 * 1024 * 1024))


def multi_head_attention(q, k, v, params, num_heads, *, use_bf16_matmul=False):
    """q, k, v: (B, S, D).  params: PyTorch-layout Linear weights/biases.

    Matches MultiHeadAttentionBlock.forward in eval mode.  When q/k/v are the
    same array (self-attention), the QKV projection is fused into one (D, 3D)
    matmul.  `use_bf16_matmul` feeds the MXU bf16 operands (f32 accumulation,
    f32 softmax) — the v6e/v7x throughput recipe; default False keeps exact f32
    parity with the PyTorch module.
    """
    B, S, D = q.shape
    assert D % num_heads == 0
    d_k = D // num_heads
    out_dtype = q.dtype

    fused_qkv = (q is k) and (k is v)
    Bb = _pick_batch_block(B, S)
    grid = (B // Bb,)
    compute_dtype = jnp.bfloat16 if use_bf16_matmul else jnp.float32
    c_itemsize = jnp.dtype(compute_dtype).itemsize

    # Pre-transpose weights: kernel computes x @ W_t + b (PyTorch x @ W.T + b).
    wq_t = params["wq"].T.astype(compute_dtype)
    wk_t = params["wk"].T.astype(compute_dtype)
    wv_t = params["wv"].T.astype(compute_dtype)
    wo_t = params["wo"].T.astype(compute_dtype)
    bq = params["bq"].reshape(1, D).astype(jnp.float32)
    bk = params["bk"].reshape(1, D).astype(jnp.float32)
    bv = params["bv"].reshape(1, D).astype(jnp.float32)
    bo = params["bo"].reshape(1, D).astype(jnp.float32)

    batch_spec = pl.BlockSpec((Bb, S, D), lambda b: (b, 0, 0))

    def const_spec(shape):
        return pl.BlockSpec(shape, lambda b: (0,) * len(shape))

    kern_kwargs = dict(num_heads=num_heads, d_k=d_k, batch_block=Bb,
                       seq_len=S, compute_dtype=compute_dtype)

    if fused_qkv:
        wqkv_t = jnp.concatenate([wq_t, wk_t, wv_t], axis=1)   # (D, 3D)
        bqkv = jnp.concatenate([bq, bk, bv], axis=1)           # (1, 3D)
        kernel = functools.partial(_mha_self_kernel, **kern_kwargs)
        in_specs = [batch_spec,
                    const_spec((D, 3 * D)), const_spec((1, 3 * D)),
                    const_spec((D, D)), const_spec((1, D))]
        inputs = (q.astype(compute_dtype), wqkv_t, bqkv, wo_t, bo)
        n_stream = 1
    else:
        kernel = functools.partial(_mha_cross_kernel, **kern_kwargs)
        in_specs = [batch_spec, batch_spec, batch_spec,
                    const_spec((D, D)), const_spec((1, D)),
                    const_spec((D, D)), const_spec((1, D)),
                    const_spec((D, D)), const_spec((1, D)),
                    const_spec((D, D)), const_spec((1, D))]
        inputs = (q.astype(compute_dtype), k.astype(compute_dtype),
                  v.astype(compute_dtype),
                  wq_t, bq, wk_t, bk, wv_t, bv, wo_t, bo)
        n_stream = 3

    # Advisory cost hint so XLA schedules surrounding ops around the custom call.
    cost = pl.CostEstimate(
        flops=8 * B * S * D * D + 4 * B * S * S * D,
        transcendentals=B * num_heads * S * S,
        bytes_accessed=(4 * B * S * D + 4 * D * D + 4 * D) * c_itemsize)

    return pl.pallas_call(
        kernel,
        out_shape=jax.ShapeDtypeStruct((B, S, D), out_dtype),
        grid_spec=pltpu.PrefetchScalarGridSpec(
            num_scalar_prefetch=0,
            grid=grid,
            in_specs=in_specs,
            out_specs=batch_spec),
        compiler_params=pltpu.CompilerParams(
            dimension_semantics=("parallel",),
            vmem_limit_bytes=_vmem_limit_bytes(
                Bb, S, D, num_heads, n_stream, c_itemsize)),
        cost_estimate=cost,
    )(*inputs)


# ------------------------------- reference --------------------------------


def _reference(q, k, v, params, num_heads):
    """Pure-JAX reference matching the PyTorch forward (eval mode)."""
    B, S, D = q.shape
    d_k = D // num_heads

    def lin(x, w, b):
        return x @ w.T + b

    Q = lin(q, params["wq"], params["bq"]).reshape(B, S, num_heads, d_k).transpose(0, 2, 1, 3)
    K = lin(k, params["wk"], params["bk"]).reshape(B, S, num_heads, d_k).transpose(0, 2, 1, 3)
    V = lin(v, params["wv"], params["bv"]).reshape(B, S, num_heads, d_k).transpose(0, 2, 1, 3)

    scores = jnp.einsum("bhqd,bhkd->bhqk", Q, K) / math.sqrt(d_k)
    probs = jax.nn.softmax(scores, axis=-1)
    ctx = jnp.einsum("bhqk,bhkd->bhqd", probs, V)
    ctx = ctx.transpose(0, 2, 1, 3).reshape(B, S, D)
    return lin(ctx, params["wo"], params["bo"])


if __name__ == "__main__":
    # NOTE: toy config.  For production, d_model (and ideally d_k) should be a
    # multiple of 128 so stores are lane-dense (full-width vst, not vst.msk).
    B, S, D, H = 2, 8, 32, 4

    key = jax.random.PRNGKey(0)
    keys = jax.random.split(key, 12)
    scale = 1.0 / math.sqrt(D)

    params = {
        "wq": jax.random.uniform(keys[0], (D, D), jnp.float32, -scale, scale),
        "bq": jax.random.uniform(keys[1], (D,), jnp.float32, -scale, scale),
        "wk": jax.random.uniform(keys[2], (D, D), jnp.float32, -scale, scale),
        "bk": jax.random.uniform(keys[3], (D,), jnp.float32, -scale, scale),
        "wv": jax.random.uniform(keys[4], (D, D), jnp.float32, -scale, scale),
        "bv": jax.random.uniform(keys[5], (D,), jnp.float32, -scale, scale),
        "wo": jax.random.uniform(keys[6], (D, D), jnp.float32, -scale, scale),
        "bo": jax.random.uniform(keys[7], (D,), jnp.float32, -scale, scale),
    }

    q = jax.random.normal(keys[8], (B, S, D), jnp.float32)
    k = jax.random.normal(keys[9], (B, S, D), jnp.float32)
    v = jax.random.normal(keys[10], (B, S, D), jnp.float32)

    # 1) General path: distinct q, k, v (cross-attention), f32 MXU inputs.
    out = jax.block_until_ready(multi_head_attention(q, k, v, params, num_heads=H))
    ref = _reference(q, k, v, params, num_heads=H)
    assert out.shape == (B, S, D)
    # Slightly looser than exact-divide: softmax uses the EUP approximate reciprocal.
    assert jnp.allclose(out, ref, atol=2e-3, rtol=2e-3), "cross-attn mismatch vs JAX reference"

    # 2) Self-attention path: exercises the fused (D, 3D) QKV projection.
    out_self = jax.block_until_ready(multi_head_attention(q, q, q, params, num_heads=H))
    ref_self = _reference(q, q, q, params, num_heads=H)
    assert jnp.allclose(out_self, ref_self, atol=2e-3, rtol=2e-3), "self-attn mismatch vs JAX reference"

    # 3) bf16 MXU-input variant (v6e/v7x throughput recipe); accumulation/softmax stay f32.
    out_bf16 = jax.block_until_ready(
        multi_head_attention(q, q, q, params, num_heads=H, use_bf16_matmul=True))
    assert jnp.allclose(out_bf16, ref_self, atol=5e-2, rtol=5e-2), "bf16 variant mismatch"

    print("KERNEL_OK")
</pallas_src>

<mosaic_0001>
module attributes {stable_mosaic.version = 11 : i64} {
  func.func @_mha_cross_kernel(%arg0: i32, %arg1: memref<1x8x32xf32, #tpu.memory_space<vmem>>, %arg2: memref<1x8x32xf32, #tpu.memory_space<vmem>>, %arg3: memref<1x8x32xf32, #tpu.memory_space<vmem>>, %arg4: memref<32x32xf32, #tpu.memory_space<vmem>>, %arg5: memref<1x32xf32, #tpu.memory_space<vmem>>, %arg6: memref<32x32xf32, #tpu.memory_space<vmem>>, %arg7: memref<1x32xf32, #tpu.memory_space<vmem>>, %arg8: memref<32x32xf32, #tpu.memory_space<vmem>>, %arg9: memref<1x32xf32, #tpu.memory_space<vmem>>, %arg10: memref<32x32xf32, #tpu.memory_space<vmem>>, %arg11: memref<1x32xf32, #tpu.memory_space<vmem>>, %arg12: memref<1x8x32xf32, #tpu.memory_space<vmem>>) attributes {dimension_semantics = [#tpu.dimension_semantics<parallel>], iteration_bounds = array<i64: 2>, scalar_prefetch = 0 : i64, scratch_operands = 0 : i64, tpu.core_type = #tpu.core_type<tc>, window_params = [{transform_indices = @transform_0, window_bounds = array<i64: 1, 8, 32>}, {transform_indices = @transform_1, window_bounds = array<i64: 1, 8, 32>}, {transform_indices = @transform_2, window_bounds = array<i64: 1, 8, 32>}, {pipeline_mode = #tpu.pipeline_mode<synchronous>, transform_indices = @transform_3, window_bounds = array<i64: 32, 32>}, {pipeline_mode = #tpu.pipeline_mode<synchronous>, transform_indices = @transform_4, window_bounds = array<i64: 1, 32>}, {pipeline_mode = #tpu.pipeline_mode<synchronous>, transform_indices = @transform_5, window_bounds = array<i64: 32, 32>}, {pipeline_mode = #tpu.pipeline_mode<synchronous>, transform_indices = @transform_6, window_bounds = array<i64: 1, 32>}, {pipeline_mode = #tpu.pipeline_mode<synchronous>, transform_indices = @transform_7, window_bounds = array<i64: 32, 32>}, {pipeline_mode = #tpu.pipeline_mode<synchronous>, transform_indices = @transform_8, window_bounds = array<i64: 1, 32>}, {pipeline_mode = #tpu.pipeline_mode<synchronous>, transform_indices = @transform_9, window_bounds = array<i64: 32, 32>}, {pipeline_mode = #tpu.pipeline_mode<synchronous>, transform_indices = @transform_10, window_bounds = array<i64: 1, 32>}, {transform_indices = @transform_11, window_bounds = array<i64: 1, 8, 32>}]} {
    %c0 = arith.constant 0 : index
    %c0_0 = arith.constant 0 : index
    %c0_1 = arith.constant 0 : index
    %0 = vector.load %arg1[%c0, %c0_0, %c0_1] : memref<1x8x32xf32, #tpu.memory_space<vmem>>, vector<1x8x32xf32>
    %1 = vector.shape_cast %0 : vector<1x8x32xf32> to vector<8x32xf32>
    %c0_2 = arith.constant 0 : index
    %c0_3 = arith.constant 0 : index
    %c0_4 = arith.constant 0 : index
    %2 = vector.load %arg2[%c0_2, %c0_3, %c0_4] : memref<1x8x32xf32, #tpu.memory_space<vmem>>, vector<1x8x32xf32>
    %3 = vector.shape_cast %2 : vector<1x8x32xf32> to vector<8x32xf32>
    %c0_5 = arith.constant 0 : index
    %c0_6 = arith.constant 0 : index
    %c0_7 = arith.constant 0 : index
    %4 = vector.load %arg3[%c0_5, %c0_6, %c0_7] : memref<1x8x32xf32, #tpu.memory_space<vmem>>, vector<1x8x32xf32>
    %5 = vector.shape_cast %4 : vector<1x8x32xf32> to vector<8x32xf32>
    %c0_8 = arith.constant 0 : index
    %c0_9 = arith.constant 0 : index
    %6 = vector.load %arg4[%c0_8, %c0_9] : memref<32x32xf32, #tpu.memory_space<vmem>>, vector<32x32xf32>
    %cst = arith.constant dense<0.000000e+00> : vector<8x32xf32>
    %7 = tpu.matmul %1, %6, %cst {dimension_numbers = #tpu.dot_dimension_numbers<[1], [0], [0], [1], [0, 0, 1, 1], [], []>} : vector<8x32xf32>, vector<32x32xf32>, vector<8x32xf32> -> vector<8x32xf32>
    %c0_10 = arith.constant 0 : index
    %c0_11 = arith.constant 0 : index
    %8 = vector.load %arg5[%c0_10, %c0_11] : memref<1x32xf32, #tpu.memory_space<vmem>>, vector<1x32xf32>
    %9 = vector.broadcast %8 : vector<1x32xf32> to vector<8x32xf32>
    %10 = arith.addf %7, %9 : vector<8x32xf32>
    %c0_12 = arith.constant 0 : index
    %c0_13 = arith.constant 0 : index
    %11 = vector.load %arg6[%c0_12, %c0_13] : memref<32x32xf32, #tpu.memory_space<vmem>>, vector<32x32xf32>
    %cst_14 = arith.constant dense<0.000000e+00> : vector<8x32xf32>
    %12 = tpu.matmul %3, %11, %cst_14 {dimension_numbers = #tpu.dot_dimension_numbers<[1], [0], [0], [1], [0, 0, 1, 1], [], []>} : vector<8x32xf32>, vector<32x32xf32>, vector<8x32xf32> -> vector<8x32xf32>
    %c0_15 = arith.constant 0 : index
    %c0_16 = arith.constant 0 : index
    %13 = vector.load %arg7[%c0_15, %c0_16] : memref<1x32xf32, #tpu.memory_space<vmem>>, vector<1x32xf32>
    %14 = vector.broadcast %13 : vector<1x32xf32> to vector<8x32xf32>
    %15 = arith.addf %12, %14 : vector<8x32xf32>
    %c0_17 = arith.constant 0 : index
    %c0_18 = arith.constant 0 : index
    %16 = vector.load %arg8[%c0_17, %c0_18] : memref<32x32xf32, #tpu.memory_space<vmem>>, vector<32x32xf32>
    %cst_19 = arith.constant dense<0.000000e+00> : vector<8x32xf32>
    %17 = tpu.matmul %5, %16, %cst_19 {dimension_numbers = #tpu.dot_dimension_numbers<[1], [0], [0], [1], [0, 0, 1, 1], [], []>} : vector<8x32xf32>, vector<32x32xf32>, vector<8x32xf32> -> vector<8x32xf32>
    %c0_20 = arith.constant 0 : index
    %c0_21 = arith.constant 0 : index
    %18 = vector.load %arg9[%c0_20, %c0_21] : memref<1x32xf32, #tpu.memory_space<vmem>>, vector<1x32xf32>
    %19 = vector.broadcast %18 : vector<1x32xf32> to vector<8x32xf32>
    %20 = arith.addf %17, %19 : vector<8x32xf32>
    %c0_22 = arith.constant 0 : index
    %c0_23 = arith.constant 0 : index
    %21 = vector.load %arg10[%c0_22, %c0_23] : memref<32x32xf32, #tpu.memory_space<vmem>>, vector<32x32xf32>
    %c0_24 = arith.constant 0 : index
    %c0_25 = arith.constant 0 : index
    %22 = vector.load %arg11[%c0_24, %c0_25] : memref<1x32xf32, #tpu.memory_space<vmem>>, vector<1x32xf32>
    %23 = vector.shape_cast %10 : vector<8x32xf32> to vector<8x4x8xf32>
    %24 = tpu.transpose %23, [1, 0, 2] : vector<8x4x8xf32> -> vector<4x8x8xf32>
    %25 = vector.shape_cast %15 : vector<8x32xf32> to vector<8x4x8xf32>
    %26 = tpu.transpose %25, [1, 0, 2] : vector<8x4x8xf32> -> vector<4x8x8xf32>
    %27 = vector.shape_cast %20 : vector<8x32xf32> to vector<8x4x8xf32>
    %28 = tpu.transpose %27, [1, 0, 2] : vector<8x4x8xf32> -> vector<4x8x8xf32>
    "tpu.trace_start"() <{level = 10 : i32, message = "gqd,gkd->gqk"}> : () -> ()
    %cst_26 = arith.constant dense<0.000000e+00> : vector<4x8x8xf32>
    %29 = tpu.matmul %24, %26, %cst_26 {dimension_numbers = #tpu.dot_dimension_numbers<[2], [2], [1], [1], [0, 0, 0, 1, 1, 1], [0], [0]>} : vector<4x8x8xf32>, vector<4x8x8xf32>, vector<4x8x8xf32> -> vector<4x8x8xf32>
    "tpu.trace_stop"() : () -> ()
    %cst_27 = arith.constant 0.353553385 : f32
    %30 = vector.broadcast %cst_27 : f32 to vector<4x8x8xf32>
    %31 = arith.mulf %29, %30 : vector<4x8x8xf32>
    %cst_28 = arith.constant dense<0xFF800000> : vector<4x8xf32>
    %32 = vector.multi_reduction <maximumf>, %31, %cst_28 [2] : vector<4x8x8xf32> to vector<4x8xf32>
    %33 = vector.shape_cast %32 : vector<4x8xf32> to vector<4x8x1xf32>
    %34 = vector.broadcast %33 : vector<4x8x1xf32> to vector<4x8x8xf32>
    %35 = arith.subf %31, %34 : vector<4x8x8xf32>
    %36 = math.exp %35 : vector<4x8x8xf32>
    %cst_29 = arith.constant dense<0.000000e+00> : vector<4x8xf32>
    %37 = vector.multi_reduction <add>, %36, %cst_29 [2] : vector<4x8x8xf32> to vector<4x8xf32>
    %38 = vector.shape_cast %37 : vector<4x8xf32> to vector<4x8x1xf32>
    %39 = tpu.reciprocal %38 {approx = true} : vector<4x8x1xf32> -> vector<4x8x1xf32>
    %40 = vector.broadcast %39 : vector<4x8x1xf32> to vector<4x8x8xf32>
    %41 = arith.mulf %36, %40 : vector<4x8x8xf32>
    "tpu.trace_start"() <{level = 10 : i32, message = "gqk,gkd->gqd"}> : () -> ()
    %cst_30 = arith.constant dense<0.000000e+00> : vector<4x8x8xf32>
    %42 = tpu.matmul %41, %28, %cst_30 {dimension_numbers = #tpu.dot_dimension_numbers<[2], [1], [1], [2], [0, 0, 0, 1, 1, 2], [0], [0]>} : vector<4x8x8xf32>, vector<4x8x8xf32>, vector<4x8x8xf32> -> vector<4x8x8xf32>
    "tpu.trace_stop"() : () -> ()
    %43 = tpu.transpose %42, [1, 0, 2] : vector<4x8x8xf32> -> vector<8x4x8xf32>
    %44 = vector.shape_cast %43 : vector<8x4x8xf32> to vector<8x32xf32>
    %cst_31 = arith.constant dense<0.000000e+00> : vector<8x32xf32>
    %45 = tpu.matmul %44, %21, %cst_31 {dimension_numbers = #tpu.dot_dimension_numbers<[1], [0], [0], [1], [0, 0, 1, 1], [], []>} : vector<8x32xf32>, vector<32x32xf32>, vector<8x32xf32> -> vector<8x32xf32>
    %46 = vector.broadcast %22 : vector<1x32xf32> to vector<8x32xf32>
    %47 = arith.addf %45, %46 : vector<8x32xf32>
    %48 = vector.shape_cast %47 : vector<8x32xf32> to vector<1x8x32xf32>
    %c0_32 = arith.constant 0 : index
    %c0_33 = arith.constant 0 : index
    %c0_34 = arith.constant 0 : index
    %49 = vector.load %arg12[%c0_32, %c0_33, %c0_34] : memref<1x8x32xf32, #tpu.memory_space<vmem>>, vector<1x8x32xf32>
    tpu.vector_store %arg12[%c0_32, %c0_33, %c0_34], %48 {strides = array<i32>} : memref<1x8x32xf32, #tpu.memory_space<vmem>>, vector<1x8x32xf32>,
    return
  }
  func.func @transform_0(%arg0: i32) -> (i32, i32, i32) {
    %c0_i32 = arith.constant 0 : i32
    %c0_i32_0 = arith.constant 0 : i32
    %c0_i32_1 = arith.constant 0 : i32
    return %arg0, %c0_i32, %c0_i32_0 : i32, i32, i32
  }
  func.func @transform_1(%arg0: i32) -> (i32, i32, i32) {
    %c0_i32 = arith.constant 0 : i32
    %c0_i32_0 = arith.constant 0 : i32
    %c0_i32_1 = arith.constant 0 : i32
    return %arg0, %c0_i32, %c0_i32_0 : i32, i32, i32
  }
  func.func @transform_2(%arg0: i32) -> (i32, i32, i32) {
    %c0_i32 = arith.constant 0 : i32
    %c0_i32_0 = arith.constant 0 : i32
    %c0_i32_1 = arith.constant 0 : i32
    return %arg0, %c0_i32, %c0_i32_0 : i32, i32, i32
  }
  func.func @transform_3(%arg0: i32) -> (i32, i32) {
    %c0_i32 = arith.constant 0 : i32
    %c0_i32_0 = arith.constant 0 : i32
    %c0_i32_1 = arith.constant 0 : i32
    return %c0_i32, %c0_i32_0 : i32, i32
  }
  func.func @transform_4(%arg0: i32) -> (i32, i32) {
    %c0_i32 = arith.constant 0 : i32
    %c0_i32_0 = arith.constant 0 : i32
    %c0_i32_1 = arith.constant 0 : i32
    return %c0_i32, %c0_i32_0 : i32, i32
  }
  func.func @transform_5(%arg0: i32) -> (i32, i32) {
    %c0_i32 = arith.constant 0 : i32
    %c0_i32_0 = arith.constant 0 : i32
    %c0_i32_1 = arith.constant 0 : i32
    return %c0_i32, %c0_i32_0 : i32, i32
  }
  func.func @transform_6(%arg0: i32) -> (i32, i32) {
    %c0_i32 = arith.constant 0 : i32
    %c0_i32_0 = arith.constant 0 : i32
    %c0_i32_1 = arith.constant 0 : i32
    return %c0_i32, %c0_i32_0 : i32, i32
  }
  func.func @transform_7(%arg0: i32) -> (i32, i32) {
    %c0_i32 = arith.constant 0 : i32
    %c0_i32_0 = arith.constant 0 : i32
    %c0_i32_1 = arith.constant 0 : i32
    return %c0_i32, %c0_i32_0 : i32, i32
  }
  func.func @transform_8(%arg0: i32) -> (i32, i32) {
    %c0_i32 = arith.constant 0 : i32
    %c0_i32_0 = arith.constant 0 : i32
    %c0_i32_1 = arith.constant 0 : i32
    return %c0_i32, %c0_i32_0 : i32, i32
  }
  func.func @transform_9(%arg0: i32) -> (i32, i32) {
    %c0_i32 = arith.constant 0 : i32
    %c0_i32_0 = arith.constant 0 : i32
    %c0_i32_1 = arith.constant 0 : i32
    return %c0_i32, %c0_i32_0 : i32, i32
  }
  func.func @transform_10(%arg0: i32) -> (i32, i32) {
    %c0_i32 = arith.constant 0 : i32
    %c0_i32_0 = arith.constant 0 : i32
    %c0_i32_1 = arith.constant 0 : i32
    return %c0_i32, %c0_i32_0 : i32, i32
  }
  func.func @transform_11(%arg0: i32) -> (i32, i32, i32) {
    %c0_i32 = arith.constant 0 : i32
    %c0_i32_0 = arith.constant 0 : i32
    %c0_i32_1 = arith.constant 0 : i32
    return %arg0, %c0_i32, %c0_i32_0 : i32, i32, i32
  }
}

</mosaic_0001>

<llo_original>
// kernel: tpu_custom_call.1
$region0: #{tpu_custom_call.1}
  #allocation0 [shape = 'u32[]', space=smem, size = 0x4, offset = 0x4, fixed_abs, tag = 'smem constant byte address 0x4 - core index']
  #allocation1 [shape = 'u32[144,128]{1,0:T(1,128)}', space=vmem, size = 0x12000, scoped, tag = 'internal scratch']
  %s0 = inlined_call_operand.hbm [shape: f32[2,8,32], index: 0, kind: input, shape index: {}]
  %s1 = inlined_call_operand.hbm [shape: f32[2,8,32], index: 1, kind: input, shape index: {}]
  %s2 = inlined_call_operand.hbm [shape: f32[2,8,32], index: 2, kind: input, shape index: {}]
  %s3 = inlined_call_operand.hbm [shape: f32[32,32], index: 3, kind: input, shape index: {}]
  %s4 = inlined_call_operand.vmem [shape: f32[1,32], index: 4, kind: input, shape index: {}]
  %s5 = inlined_call_operand.hbm [shape: f32[32,32], index: 5, kind: input, shape index: {}]
  %s6 = inlined_call_operand.vmem [shape: f32[1,32], index: 6, kind: input, shape index: {}]
  %s7 = inlined_call_operand.hbm [shape: f32[32,32], index: 7, kind: input, shape index: {}]
  %s8 = inlined_call_operand.vmem [shape: f32[1,32], index: 8, kind: input, shape index: {}]
  %s9 = inlined_call_operand.hbm [shape: f32[32,32], index: 9, kind: input, shape index: {}]
  %s10 = inlined_call_operand.vmem [shape: f32[1,32], index: 10, kind: input, shape index: {}]
  %s11 = inlined_call_operand.hbm [shape: f32[2,8,32], index: 11, kind: output, shape index: {}]
  %s12 = sld [smem:[#allocation0]]
  $region105: #{tpu_custom_call.1} parent=0
    _
  %s14 = ssub.s32 1, %s12
  %s15 = scalar_select 0, %s14, %s12
  $region1: #{tpu_custom_call.1} parent=0
    #allocation2 [shape = 'u8[8192]{0}', space=vmem, size = 0x2000, scoped, tag = 'input window, operand 0']
    #allocation3 [shape = 's32[2]{0}', space=sflag, size = 0x8, scoped, tag = 'scoped memory for tpu_custom_call.1']
    #allocation4 [shape = 's32[2]{0}', space=sflag, size = 0x8, scoped, tag = 'scoped memory for tpu_custom_call.1']
    #allocation5 [shape = 'u8[8192]{0}', space=vmem, size = 0x2000, scoped, tag = 'input window, operand 1']
    #allocation6 [shape = 's32[2]{0}', space=sflag, size = 0x8, scoped, tag = 'scoped memory for tpu_custom_call.1']
    #allocation7 [shape = 'u8[8192]{0}', space=vmem, size = 0x2000, scoped, tag = 'input window, operand 2']
    #allocation8 [shape = 'u8[16384]{0}', space=vmem, size = 0x4000, scoped, tag = 'input window, operand 3, single buffered']
    #allocation9 [shape = 's32[1]{0}', space=sflag, size = 0x4, scoped, tag = 'scoped memory for tpu_custom_call.1']
    #allocation10 [shape = 'u8[16384]{0}', space=vmem, size = 0x4000, scoped, tag = 'input window, operand 5, single buffered']
    #allocation11 [shape = 'u8[16384]{0}', space=vmem, size = 0x4000, scoped, tag = 'input window, operand 7, single buffered']
    #allocation12 [shape = 's32[1]{0}', space=sflag, size = 0x4, scoped, tag = 'scoped memory for tpu_custom_call.1']
    #allocation13 [shape = 'u8[16384]{0}', space=vmem, size = 0x4000, scoped, tag = 'input window, operand 9, single buffered']
    #allocation14 [shape = 'u8[8192]{0}', space=vmem, size = 0x2000, scoped, tag = 'output window, operand 0']
    %16 = vsyncpa [#allocation3], 0
    %s17 = scalar_lea.sflag [#allocation3], 1
    %18 = vsyncpa %s17, 0
    %19 = vsyncpa [#allocation6], 0
    %s20 = scalar_lea.sflag [#allocation6], 1
    %21 = vsyncpa %s20, 0
    %22 = vsyncpa [#allocation9], 0
    %23 = vsyncpa [#allocation12], 0
    %24 = vsyncpa [#allocation4], 0
    %s25 = scalar_lea.sflag [#allocation4], 1
    %26 = vsyncpa %s25, 0
    loop: start=0, step=1, limit=4
    $region2: #{tpu_custom_call.1} parent=1 // loop_pre_header
      _
    $region3: #{tpu_custom_call.1} parent=1 // loop_header
      %s28 = sphi 0, %s32
      %p29 = scmp.ge.s32.totalorder %s28, 4
      %s38 = sphi 0, %s40
      %s41 = sphi 0, %s38
      %s42 = sphi 0, %s41
      %s58 = sphi 0, %s42
      %s64 = sphi 0, %s66
      %s67 = sphi 0, %s64
      %s68 = sphi 0, %s67
      %s84 = sphi 0, %s68
      %s90 = sphi 0, %s92
      %s93 = sphi 0, %s90
      %s94 = sphi 0, %s93
      %s110 = sphi 0, %s94
      %s114 = sphi 0, %s114
      %s116 = sphi 0, %s114
      %s117 = sphi 0, %s116
      %s131 = sphi 0, %s117
      %s135 = sphi 0, %s135
      %s137 = sphi 0, %s135
      %s138 = sphi 0, %s137
      %s152 = sphi 0, %s138
      %s156 = sphi 0, %s156
      %s158 = sphi 0, %s156
      %s159 = sphi 0, %s158
      %s173 = sphi 0, %s159
      %s177 = sphi 0, %s177
      %s179 = sphi 0, %s177
      %s180 = sphi 0, %s179
      %s194 = sphi 0, %s180
      %s198 = sphi 0, %s198
      %s200 = sphi 0, %s198
      %s201 = sphi 0, %s200
      %s215 = sphi 0, %s201
      %s219 = sphi 0, %s219
      %s221 = sphi 0, %s219
      %s222 = sphi 0, %s221
      %s236 = sphi 0, %s222
      %s240 = sphi 0, %s240
      %s242 = sphi 0, %s240
      %s243 = sphi 0, %s242
      %s257 = sphi 0, %s243
      %s261 = sphi 0, %s261
      %s263 = sphi 0, %s261
      %s264 = sphi 0, %s263
      %s278 = sphi 0, %s264
      %s284 = sphi 0, %s286
      %s287 = sphi 0, %s284
      %s288 = sphi 0, %s287
      %s304 = sphi 0, %s288
    $region4: #{tpu_custom_call.1} parent=1 // loop_header_branch
      %31 = sbr.rel (%p29) target = $region8
    $region5: #{tpu_custom_call.1} parent=1 // loop_body
      %s33 = ssub.s32 %s28, 1
      %s34 = ssub.s32 %s28, 2
      %s35 = sadd.s32 %s28, 1
      %s36 = ssub.s32 %s28, %s35
      %p37 = scmp.eq.s32.totalorder %s36, 0
      %s39 = sadd.s32 %s38, 1
      %s40 = scalar_select %p37, %s38, %s39
      %p43 = pneg %p37
      %p44 = scmp.eq.s32.totalorder %s28, 1
      %p45 = por %p43, %p44
      %p46 = scmp.ne.s32.totalorder %s38, %s41
      %p47 = scmp.eq.s32.totalorder %s28, 0
      %p48 = por %p46, %p47
      %p49 = scmp.ne.s32.totalorder %s38, %s41
      %p50 = scmp.eq.s32.totalorder %s33, 1
      %p51 = por %p49, %p50
      %p52 = scmp.ne.s32.totalorder %s41, %s42
      %p53 = scmp.eq.s32.totalorder %s33, 0
      %p54 = por %p52, %p53
      %p55 = scmp.ne.s32.totalorder %s41, %s42
      %p56 = scmp.eq.s32.totalorder %s34, 1
      %p57 = por %p55, %p56
      %p59 = scmp.ne.s32.totalorder %s42, %s58
      %p60 = scmp.eq.s32.totalorder %s34, 0
      %p61 = por %p59, %p60
      %s62 = ssub.s32 %s28, %s35
      %p63 = scmp.eq.s32.totalorder %s62, 0
      %s65 = sadd.s32 %s64, 1
      %s66 = scalar_select %p63, %s64, %s65
      %p69 = pneg %p63
      %p70 = scmp.eq.s32.totalorder %s28, 1
      %p71 = por %p69, %p70
      %p72 = scmp.ne.s32.totalorder %s64, %s67
      %p73 = scmp.eq.s32.totalorder %s28, 0
      %p74 = por %p72, %p73
      %p75 = scmp.ne.s32.totalorder %s64, %s67
      %p76 = scmp.eq.s32.totalorder %s33, 1
      %p77 = por %p75, %p76
      %p78 = scmp.ne.s32.totalorder %s67, %s68
      %p79 = scmp.eq.s32.totalorder %s33, 0
      %p80 = por %p78, %p79
      %p81 = scmp.ne.s32.totalorder %s67, %s68
      %p82 = scmp.eq.s32.totalorder %s34, 1
      %p83 = por %p81, %p82
      %p85 = scmp.ne.s32.totalorder %s68, %s84
      %p86 = scmp.eq.s32.totalorder %s34, 0
      %p87 = por %p85, %p86
      %s88 = ssub.s32 %s28, %s35
      %p89 = scmp.eq.s32.totalorder %s88, 0
      %s91 = sadd.s32 %s90, 1
      %s92 = scalar_select %p89, %s90, %s91
      %p95 = pneg %p89
      %p96 = scmp.eq.s32.totalorder %s28, 1
      %p97 = por %p95, %p96
      %p98 = scmp.ne.s32.totalorder %s90, %s93
      %p99 = scmp.eq.s32.totalorder %s28, 0
      %p100 = por %p98, %p99
      %p101 = scmp.ne.s32.totalorder %s90, %s93
      %p102 = scmp.eq.s32.totalorder %s33, 1
      %p103 = por %p101, %p102
      %p104 = scmp.ne.s32.totalorder %s93, %s94
      %p105 = scmp.eq.s32.totalorder %s33, 0
      %p106 = por %p104, %p105
      %p107 = scmp.ne.s32.totalorder %s93, %s94
      %p108 = scmp.eq.s32.totalorder %s34, 1
      %p109 = por %p107, %p108
      %p111 = scmp.ne.s32.totalorder %s94, %s110
      %p112 = scmp.eq.s32.totalorder %s34, 0
      %p113 = por %p111, %p112
      %s115 = sadd.s32 %s114, 1
      %p118 = scmp.eq.s32.totalorder %s28, 1
      %p119 = scmp.ne.s32.totalorder %s114, %s116
      %p120 = scmp.eq.s32.totalorder %s28, 0
      %p121 = por %p119, %p120
      %p122 = scmp.ne.s32.totalorder %s114, %s116
      %p123 = scmp.eq.s32.totalorder %s33, 1
      %p124 = por %p122, %p123
      %p125 = scmp.ne.s32.totalorder %s116, %s117
      %p126 = scmp.eq.s32.totalorder %s33, 0
      %p127 = por %p125, %p126
      %p128 = scmp.ne.s32.totalorder %s116, %s117
      %p129 = scmp.eq.s32.totalorder %s34, 1
      %p130 = por %p128, %p129
      %p132 = scmp.ne.s32.totalorder %s117, %s131
      %p133 = scmp.eq.s32.totalorder %s34, 0
      %p134 = por %p132, %p133
      %s136 = sadd.s32 %s135, 1
      %p139 = scmp.eq.s32.totalorder %s28, 1
      %p140 = scmp.ne.s32.totalorder %s135, %s137
      %p141 = scmp.eq.s32.totalorder %s28, 0
      %p142 = por %p140, %p141
      %p143 = scmp.ne.s32.totalorder %s135, %s137
      %p144 = scmp.eq.s32.totalorder %s33, 1
      %p145 = por %p143, %p144
      %p146 = scmp.ne.s32.totalorder %s137, %s138
      %p147 = scmp.eq.s32.totalorder %s33, 0
      %p148 = por %p146, %p147
      %p149 = scmp.ne.s32.totalorder %s137, %s138
      %p150 = scmp.eq.s32.totalorder %s34, 1
      %p151 = por %p149, %p150
      %p153 = scmp.ne.s32.totalorder %s138, %s152
      %p154 = scmp.eq.s32.totalorder %s34, 0
      %p155 = por %p153, %p154
      %s157 = sadd.s32 %s156, 1
      %p160 = scmp.eq.s32.totalorder %s28, 1
      %p161 = scmp.ne.s32.totalorder %s156, %s158
      %p162 = scmp.eq.s32.totalorder %s28, 0
      %p163 = por %p161, %p162
      %p164 = scmp.ne.s32.totalorder %s156, %s158
      %p165 = scmp.eq.s32.totalorder %s33, 1
      %p166 = por %p164, %p165
      %p167 = scmp.ne.s32.totalorder %s158, %s159
      %p168 = scmp.eq.s32.totalorder %s33, 0
      %p169 = por %p167, %p168
      %p170 = scmp.ne.s32.totalorder %s158, %s159
      %p171 = scmp.eq.s32.totalorder %s34, 1
      %p172 = por %p170, %p171
      %p174 = scmp.ne.s32.totalorder %s159, %s173
      %p175 = scmp.eq.s32.totalorder %s34, 0
      %p176 = por %p174, %p175
      %s178 = sadd.s32 %s177, 1
      %p181 = scmp.eq.s32.totalorder %s28, 1
      %p182 = scmp.ne.s32.totalorder %s177, %s179
      %p183 = scmp.eq.s32.totalorder %s28, 0
      %p184 = por %p182, %p183
      %p185 = scmp.ne.s32.totalorder %s177, %s179
      %p186 = scmp.eq.s32.totalorder %s33, 1
      %p187 = por %p185, %p186
      %p188 = scmp.ne.s32.totalorder %s179, %s180
      %p189 = scmp.eq.s32.totalorder %s33, 0
      %p190 = por %p188, %p189
      %p191 = scmp.ne.s32.totalorder %s179, %s180
      %p192 = scmp.eq.s32.totalorder %s34, 1
      %p193 = por %p191, %p192
      %p195 = scmp.ne.s32.totalorder %s180, %s194
      %p196 = scmp.eq.s32.totalorder %s34, 0
      %p197 = por %p195, %p196
      %s199 = sadd.s32 %s198, 1
      %p202 = scmp.eq.s32.totalorder %s28, 1
      %p203 = scmp.ne.s32.totalorder %s198, %s200
      %p204 = scmp.eq.s32.totalorder %s28, 0
      %p205 = por %p203, %p204
      %p206 = scmp.ne.s32.totalorder %s198, %s200
      %p207 = scmp.eq.s32.totalorder %s33, 1
      %p208 = por %p206, %p207
      %p209 = scmp.ne.s32.totalorder %s200, %s201
      %p210 = scmp.eq.s32.totalorder %s33, 0
      %p211 = por %p209, %p210
      %p212 = scmp.ne.s32.totalorder %s200, %s201
      %p213 = scmp.eq.s32.totalorder %s34, 1
      %p214 = por %p212, %p213
      %p216 = scmp.ne.s32.totalorder %s201, %s215
      %p217 = scmp.eq.s32.totalorder %s34, 0
      %p218 = por %p216, %p217
      %s220 = sadd.s32 %s219, 1
      %p223 = scmp.eq.s32.totalorder %s28, 1
      %p224 = scmp.ne.s32.totalorder %s219, %s221
      %p225 = scmp.eq.s32.totalorder %s28, 0
      %p226 = por %p224, %p225
      %p227 = scmp.ne.s32.totalorder %s219, %s221
      %p228 = scmp.eq.s32.totalorder %s33, 1
      %p229 = por %p227, %p228
      %p230 = scmp.ne.s32.totalorder %s221, %s222
      %p231 = scmp.eq.s32.totalorder %s33, 0
      %p232 = por %p230, %p231
      %p233 = scmp.ne.s32.totalorder %s221, %s222
      %p234 = scmp.eq.s32.totalorder %s34, 1
      %p235 = por %p233, %p234
      %p237 = scmp.ne.s32.totalorder %s222, %s236
      %p238 = scmp.eq.s32.totalorder %s34, 0
      %p239 = por %p237, %p238
      %s241 = sadd.s32 %s240, 1
      %p244 = scmp.eq.s32.totalorder %s28, 1
      %p245 = scmp.ne.s32.totalorder %s240, %s242
      %p246 = scmp.eq.s32.totalorder %s28, 0
      %p247 = por %p245, %p246
      %p248 = scmp.ne.s32.totalorder %s240, %s242
      %p249 = scmp.eq.s32.totalorder %s33, 1
      %p250 = por %p248, %p249
      %p251 = scmp.ne.s32.totalorder %s242, %s243
      %p252 = scmp.eq.s32.totalorder %s33, 0
      %p253 = por %p251, %p252
      %p254 = scmp.ne.s32.totalorder %s242, %s243
      %p255 = scmp.eq.s32.totalorder %s34, 1
      %p256 = por %p254, %p255
      %p258 = scmp.ne.s32.totalorder %s243, %s257
      %p259 = scmp.eq.s32.totalorder %s34, 0
      %p260 = por %p258, %p259
      %s262 = sadd.s32 %s261, 1
      %p265 = scmp.eq.s32.totalorder %s28, 1
      %p266 = scmp.ne.s32.totalorder %s261, %s263
      %p267 = scmp.eq.s32.totalorder %s28, 0
      %p268 = por %p266, %p267
      %p269 = scmp.ne.s32.totalorder %s261, %s263
      %p270 = scmp.eq.s32.totalorder %s33, 1
      %p271 = por %p269, %p270
      %p272 = scmp.ne.s32.totalorder %s263, %s264
      %p273 = scmp.eq.s32.totalorder %s33, 0
      %p274 = por %p272, %p273
      %p275 = scmp.ne.s32.totalorder %s263, %s264
      %p276 = scmp.eq.s32.totalorder %s34, 1
      %p277 = por %p275, %p276
      %p279 = scmp.ne.s32.totalorder %s264, %s278
      %p280 = scmp.eq.s32.totalorder %s34, 0
      %p281 = por %p279, %p280
      %s282 = ssub.s32 %s28, %s35
      %p283 = scmp.eq.s32.totalorder %s282, 0
      %s285 = sadd.s32 %s284, 1
      %s286 = scalar_select %p283, %s284, %s285
      %p289 = pneg %p283
      %p290 = scmp.eq.s32.totalorder %s28, 1
      %p291 = por %p289, %p290
      %p292 = scmp.ne.s32.totalorder %s284, %s287
      %p293 = scmp.eq.s32.totalorder %s28, 0
      %p294 = por %p292, %p293
      %p295 = scmp.ne.s32.totalorder %s284, %s287
      %p296 = scmp.eq.s32.totalorder %s33, 1
      %p297 = por %p295, %p296
      %p298 = scmp.ne.s32.totalorder %s287, %s288
      %p299 = scmp.eq.s32.totalorder %s33, 0
      %p300 = por %p298, %p299
      %p301 = scmp.ne.s32.totalorder %s287, %s288
      %p302 = scmp.eq.s32.totalorder %s34, 1
      %p303 = por %p301, %p302
      %p305 = scmp.ne.s32.totalorder %s288, %s304
      %p306 = scmp.eq.s32.totalorder %s34, 0
      %p307 = por %p305, %p306
      %p308 = scmp.le.s32.totalorder 1, %s28
      %p309 = scmp.lt.s32.totalorder %s28, 3
      %p310 = pnand %p308, %p309
      %p311 = pneg %p310
      // Predicated region
      $region9: #{tpu_custom_call.1} parent=5 // pred_check
        _
      $region10: #{tpu_custom_call.1} parent=5 // pred_check_branch
        %313 = sbr.rel (%p310) target = $region12
      $region11: #{tpu_custom_call.1} parent=5 // pred_region
        %s314 = ssub.s32 %s28, 1
        // Predicated region
        $region13: #{tpu_custom_call.1} parent=11 // pred_check
          %p315 = pneg %p127
        $region14: #{tpu_custom_call.1} parent=11 // pred_check_branch
          %317 = sbr.rel (%p315) target = $region16
        $region15: #{tpu_custom_call.1} parent=11 // pred_region
          %s319 = ssub.s32 512, 512
          %320 = vsyncadd [#allocation9], %s319
          %s321 = sshll.u32 [#allocation8], 4
          %s322 = int_to_ptr.vmem [resolvable:$true] %s321
          %327 = dma.hbm_to_vmem [thread:$0]  %s3, 512, %s322, [#allocation9], 128, 128, 8
        $region16: #{tpu_custom_call.1} parent=11 // pred_fallthru
          _
        // Predicated region
        $region17: #{tpu_custom_call.1} parent=11 // pred_check
          %p328 = pneg %p148
        $region18: #{tpu_custom_call.1} parent=11 // pred_check_branch
          %330 = sbr.rel (%p328) target = $region20
        $region19: #{tpu_custom_call.1} parent=11 // pred_region
          _
        $region20: #{tpu_custom_call.1} parent=11 // pred_fallthru
          _
        // Predicated region
        $region21: #{tpu_custom_call.1} parent=11 // pred_check
          %p331 = pneg %p169
        $region22: #{tpu_custom_call.1} parent=11 // pred_check_branch
          %333 = sbr.rel (%p331) target = $region24
        $region23: #{tpu_custom_call.1} parent=11 // pred_region
          %s335 = ssub.s32 512, 512
          %336 = vsyncadd [#allocation9], %s335
          %s337 = sshll.u32 [#allocation10], 4
          %s338 = int_to_ptr.vmem [resolvable:$true] %s337
          %343 = dma.hbm_to_vmem [thread:$0]  %s5, 512, %s338, [#allocation9], 128, 128, 8
        $region24: #{tpu_custom_call.1} parent=11 // pred_fallthru
          _
        // Predicated region
        $region25: #{tpu_custom_call.1} parent=11 // pred_check
          %p344 = pneg %p190
        $region26: #{tpu_custom_call.1} parent=11 // pred_check_branch
          %346 = sbr.rel (%p344) target = $region28
        $region27: #{tpu_custom_call.1} parent=11 // pred_region
          _
        $region28: #{tpu_custom_call.1} parent=11 // pred_fallthru
          _
        // Predicated region
        $region29: #{tpu_custom_call.1} parent=11 // pred_check
          %p347 = pneg %p211
        $region30: #{tpu_custom_call.1} parent=11 // pred_check_branch
          %349 = sbr.rel (%p347) target = $region32
        $region31: #{tpu_custom_call.1} parent=11 // pred_region
          %s351 = ssub.s32 512, 512
          %352 = vsyncadd [#allocation12], %s351
          %s353 = sshll.u32 [#allocation11], 4
          %s354 = int_to_ptr.vmem [resolvable:$true] %s353
          %359 = dma.hbm_to_vmem [thread:$0]  %s7, 512, %s354, [#allocation12], 128, 128, 8
        $region32: #{tpu_custom_call.1} parent=11 // pred_fallthru
          _
        // Predicated region
        $region33: #{tpu_custom_call.1} parent=11 // pred_check
          %p360 = pneg %p232
        $region34: #{tpu_custom_call.1} parent=11 // pred_check_branch
          %362 = sbr.rel (%p360) target = $region36
        $region35: #{tpu_custom_call.1} parent=11 // pred_region
          _
        $region36: #{tpu_custom_call.1} parent=11 // pred_fallthru
          _
        // Predicated region
        $region37: #{tpu_custom_call.1} parent=11 // pred_check
          %p363 = pneg %p253
        $region38: #{tpu_custom_call.1} parent=11 // pred_check_branch
          %365 = sbr.rel (%p363) target = $region40
        $region39: #{tpu_custom_call.1} parent=11 // pred_region
          %s367 = ssub.s32 512, 512
          %368 = vsyncadd [#allocation12], %s367
          %s369 = sshll.u32 [#allocation13], 4
          %s370 = int_to_ptr.vmem [resolvable:$true] %s369
          %375 = dma.hbm_to_vmem [thread:$0]  %s9, 512, %s370, [#allocation12], 128, 128, 8
        $region40: #{tpu_custom_call.1} parent=11 // pred_fallthru
          _
        // Predicated region
        $region41: #{tpu_custom_call.1} parent=11 // pred_check
          %p376 = pneg %p274
        $region42: #{tpu_custom_call.1} parent=11 // pred_check_branch
          %378 = sbr.rel (%p376) target = $region44
        $region43: #{tpu_custom_call.1} parent=11 // pred_region
          _
        $region44: #{tpu_custom_call.1} parent=11 // pred_fallthru
          _
      $region12: #{tpu_custom_call.1} parent=5 // pred_fallthru
        _
      %p379 = scmp.lt.s32.totalorder %s28, 2
      // Predicated region
      $region45: #{tpu_custom_call.1} parent=5 // pred_check
        %p380 = pneg %p379
      $region46: #{tpu_custom_call.1} parent=5 // pred_check_branch
        %382 = sbr.rel (%p380) target = $region48
      $region47: #{tpu_custom_call.1} parent=5 // pred_region
        // Predicated region
        $region49: #{tpu_custom_call.1} parent=47 // pred_check
          %p383 = pneg %p48
        $region50: #{tpu_custom_call.1} parent=47 // pred_check_branch
          %385 = sbr.rel (%p383) target = $region52
        $region51: #{tpu_custom_call.1} parent=47 // pred_region
          %s386 = sand.u32 %s38, 1
          %s387 = scalar_lea.sflag [#allocation3], %s386
          %s388 = sand.u32 %s38, 1
          %s389 = smul.addr %s388, 8
          %s390 = scalar_lea.vmem [#allocation2], %s389
          %s392 = ssub.s32 128, 128
          %393 = vsyncadd %s387, %s392
          %s394 = smul.addr %s28, 128
          %s395 = scalar_lea.hbm %s0, %s394
          %s397 = sshll.u32 %s390, 4
          %s398 = int_to_ptr.vmem [resolvable:$true] %s397
          %400 = dma.hbm_to_vmem [thread:$0]  %s395, 128, %s398, %s387
        $region52: #{tpu_custom_call.1} parent=47 // pred_fallthru
          _
        // Predicated region
        $region53: #{tpu_custom_call.1} parent=47 // pred_check
          %p401 = pneg %p74
        $region54: #{tpu_custom_call.1} parent=47 // pred_check_branch
          %403 = sbr.rel (%p401) target = $region56
        $region55: #{tpu_custom_call.1} parent=47 // pred_region
          %s404 = sand.u32 %s28, 1
          %s405 = scalar_lea.sflag [#allocation6], %s404
          %s406 = sand.u32 %s64, 1
          %s407 = smul.addr %s406, 8
          %s408 = scalar_lea.vmem [#allocation5], %s407
          %s410 = ssub.s32 128, 128
          %411 = vsyncadd %s405, %s410
          %s412 = smul.addr %s28, 128
          %s413 = scalar_lea.hbm %s1, %s412
          %s415 = sshll.u32 %s408, 4
          %s416 = int_to_ptr.vmem [resolvable:$true] %s415
          %418 = dma.hbm_to_vmem [thread:$0]  %s413, 128, %s416, %s405
        $region56: #{tpu_custom_call.1} parent=47 // pred_fallthru
          _
        // Predicated region
        $region57: #{tpu_custom_call.1} parent=47 // pred_check
          %p419 = pneg %p100
        $region58: #{tpu_custom_call.1} parent=47 // pred_check_branch
          %421 = sbr.rel (%p419) target = $region60
        $region59: #{tpu_custom_call.1} parent=47 // pred_region
          %s422 = sand.u32 %s28, 1
          %s423 = scalar_lea.sflag [#allocation6], %s422
          %s424 = sand.u32 %s90, 1
          %s425 = smul.addr %s424, 8
          %s426 = scalar_lea.vmem [#allocation7], %s425
          %s428 = ssub.s32 128, 128
          %429 = vsyncadd %s423, %s428
          %s430 = smul.addr %s28, 128
          %s431 = scalar_lea.hbm %s2, %s430
          %s433 = sshll.u32 %s426, 4
          %s434 = int_to_ptr.vmem [resolvable:$true] %s433
          %436 = dma.hbm_to_vmem [thread:$0]  %s431, 128, %s434, %s423
        $region60: #{tpu_custom_call.1} parent=47 // pred_fallthru
          _
      $region48: #{tpu_custom_call.1} parent=5 // pred_fallthru
        _
      %p437 = scmp.le.s32.totalorder 1, %s28
      %p438 = scmp.lt.s32.totalorder %s28, 3
      %p439 = pnand %p437, %p438
      %p440 = pneg %p439
      // Predicated region
      $region61: #{tpu_custom_call.1} parent=5 // pred_check
        _
      $region62: #{tpu_custom_call.1} parent=5 // pred_check_branch
        %442 = sbr.rel (%p439) target = $region64
      $region63: #{tpu_custom_call.1} parent=5 // pred_region
        %s443 = ssub.s32 %s28, 1
        %s444 = sand.u32 %s41, 1
        %s445 = scalar_lea.sflag [#allocation3], %s444
        %s446 = sand.u32 %s41, 1
        %s447 = smul.addr %s446, 8
        %s448 = scalar_lea.vmem [#allocation2], %s447
        // Predicated region
        $region65: #{tpu_custom_call.1} parent=63 // pred_check
          %p449 = pneg %p54
        $region66: #{tpu_custom_call.1} parent=63 // pred_check_branch
          %451 = sbr.rel (%p449) target = $region68
        $region67: #{tpu_custom_call.1} parent=63 // pred_region
          %452 = dma.done %s445, 128
        $region68: #{tpu_custom_call.1} parent=63 // pred_fallthru
          _
        %s453 = sand.u32 %s33, 1
        %s454 = scalar_lea.sflag [#allocation6], %s453
        %s455 = sand.u32 %s67, 1
        %s456 = smul.addr %s455, 8
        %s457 = scalar_lea.vmem [#allocation5], %s456
        // Predicated region
        $region69: #{tpu_custom_call.1} parent=63 // pred_check
          %p458 = pneg %p80
        $region70: #{tpu_custom_call.1} parent=63 // pred_check_branch
          %460 = sbr.rel (%p458) target = $region72
        $region71: #{tpu_custom_call.1} parent=63 // pred_region
          %461 = dma.done %s454, 128
        $region72: #{tpu_custom_call.1} parent=63 // pred_fallthru
          _
        %s462 = sand.u32 %s33, 1
        %s463 = scalar_lea.sflag [#allocation6], %s462
        %s464 = sand.u32 %s93, 1
        %s465 = smul.addr %s464, 8
        %s466 = scalar_lea.vmem [#allocation7], %s465
        // Predicated region
        $region73: #{tpu_custom_call.1} parent=63 // pred_check
          %p467 = pneg %p106
        $region74: #{tpu_custom_call.1} parent=63 // pred_check_branch
          %469 = sbr.rel (%p467) target = $region76
        $region75: #{tpu_custom_call.1} parent=63 // pred_region
          %470 = dma.done %s463, 128
        $region76: #{tpu_custom_call.1} parent=63 // pred_fallthru
          _
        // Predicated region
        $region77: #{tpu_custom_call.1} parent=63 // pred_check
          %p471 = pneg %p127
        $region78: #{tpu_custom_call.1} parent=63 // pred_check_branch
          %473 = sbr.rel (%p471) target = $region80
        $region79: #{tpu_custom_call.1} parent=63 // pred_region
          %474 = dma.done [#allocation9], 512
        $region80: #{tpu_custom_call.1} parent=63 // pred_fallthru
          _
        // Predicated region
        $region81: #{tpu_custom_call.1} parent=63 // pred_check
          %p475 = pneg %p169
        $region82: #{tpu_custom_call.1} parent=63 // pred_check_branch
          %477 = sbr.rel (%p475) target = $region84
        $region83: #{tpu_custom_call.1} parent=63 // pred_region
          %478 = dma.done [#allocation9], 512
        $region84: #{tpu_custom_call.1} parent=63 // pred_fallthru
          _
        // Predicated region
        $region85: #{tpu_custom_call.1} parent=63 // pred_check
          %p479 = pneg %p211
        $region86: #{tpu_custom_call.1} parent=63 // pred_check_branch
          %481 = sbr.rel (%p479) target = $region88
        $region87: #{tpu_custom_call.1} parent=63 // pred_region
          %482 = dma.done [#allocation12], 512
        $region88: #{tpu_custom_call.1} parent=63 // pred_fallthru
          _
        // Predicated region
        $region89: #{tpu_custom_call.1} parent=63 // pred_check
          %p483 = pneg %p253
        $region90: #{tpu_custom_call.1} parent=63 // pred_check_branch
          %485 = sbr.rel (%p483) target = $region92
        $region91: #{tpu_custom_call.1} parent=63 // pred_region
          %486 = dma.done [#allocation12], 512
        $region92: #{tpu_custom_call.1} parent=63 // pred_fallthru
          _
        %s487 = sand.u32 %s41, 1
        %s488 = scalar_lea.sflag [#allocation3], %s487
        %s489 = sand.u32 %s41, 1
        %s490 = smul.addr %s489, 8
        %s491 = scalar_lea.vmem [#allocation2], %s490
        %p492 = pneg %p54
        %p493 = pneg %p51
        %s494 = sand.u32 %s33, 1
        %s495 = scalar_lea.sflag [#allocation6], %s494
        %s496 = sand.u32 %s67, 1
        %s497 = smul.addr %s496, 8
        %s498 = scalar_lea.vmem [#allocation5], %s497
        %p499 = pneg %p80
        %p500 = pneg %p77
        %s501 = sand.u32 %s33, 1
        %s502 = scalar_lea.sflag [#allocation6], %s501
        %s503 = sand.u32 %s93, 1
        %s504 = smul.addr %s503, 8
        %s505 = scalar_lea.vmem [#allocation7], %s504
        %p506 = pneg %p106
        %p507 = pneg %p103
        %p508 = pneg %p127
        %p509 = pneg %p124
        %p510 = pneg %p148
        %p511 = pneg %p145
        %p512 = pneg %p169
        %p513 = pneg %p166
        %p514 = pneg %p190
        %p515 = pneg %p187
        %p516 = pneg %p211
        %p517 = pneg %p208
        %p518 = pneg %p232
        %p519 = pneg %p229
        %p520 = pneg %p253
        %p521 = pneg %p250
        %p522 = pneg %p274
        %p523 = pneg %p271
        %p524 = pneg %p300
        %p525 = pneg %p297
        %s526 = sand.u32 %s287, 1
        %s527 = scalar_lea.sflag [#allocation4], %s526
        %s528 = sand.u32 %s287, 1
        %s529 = smul.addr %s528, 8
        %s530 = scalar_lea.vmem [#allocation14], %s529
        %v531 = vld [vmem:[%s448] sm:$0xff]
        %v532 = vld [vmem:[%s457] sm:$0xff]
        %v533 = vld [vmem:[%s466] sm:$0xff]
        %v534 = vld [vmem:[#allocation8] sm:$0xff]
        %v535 = vld [vmem:[#allocation8 + $0x8] sm:$0xff]
        %v536 = vld [vmem:[#allocation8 + $0x10] sm:$0xff]
        %v537 = vld [vmem:[#allocation8 + $0x18] sm:$0xff]
        %v538 = vld [vmem:[%s4] sm:$0x1]
        %v540 = vlaneseq
        %v541 = vshrl.u32 %v540, 7
        %v542 = vsub.s32 0, %v541
        %v543 = vrot.slane %v538, %v542
        %vm545 = vcmask 261120
        %v547 = vsel %vm545, %v531, 0
        %549 = vmatprep.subr.mxu0 0.0
        %550 = vmatpush1.msra.mxu0 0.0
        %551 = vmatprep.subr.mxu0 0.0
        %552 = vmatpush1.msra.mxu0 0.0
        %553 = vmatprep.subr.mxu0 0.0
        %554 = vmatpush1.msra.mxu0 0.0
        %555 = vmatprep.subr.mxu0 0.0
        %556 = vmatpush1.msra.mxu0 0.0
        %557 = vmatprep.subr.mxu0 0.0
        %558 = vmatpush1.msra.mxu0 0.0
        %559 = vmatprep.subr.mxu0 0.0
        %560 = vmatpush1.msra.mxu0 0.0
        %561 = vmatprep.subr.mxu0 0.0
        %562 = vmatpush1.msra.mxu0 0.0
        %563 = vmatprep.subr.mxu0 0.0
        %564 = vmatpush1.msra.mxu0 0.0
        %565 = vmatprep.subr.mxu0 0.0
        %566 = vmatpush1.msra.mxu0 0.0
        %567 = vmatprep.subr.mxu0 0.0
        %568 = vmatpush1.msra.mxu0 0.0
        %569 = vmatprep.subr.mxu0 0.0
        %570 = vmatpush1.msra.mxu0 0.0
        %571 = vmatprep.subr.mxu0 0.0
        %572 = vmatpush1.msra.mxu0 0.0
        %573 = vmatprep.subr.mxu0 0.0
        %574 = vmatpush1.msra.mxu0 %v537
        %575 = vmatprep.subr.mxu0 0.0
        %576 = vmatpush1.msra.mxu0 %v536
        %577 = vmatprep.subr.mxu0 0.0
        %578 = vmatpush1.msra.mxu0 %v535
        %579 = vmatprep.subr.mxu0 0.0
        %580 = vmatpush1.msra.mxu0 %v534
        %581 = vmatprep.subr.mxu0 0.0
        %582 = vmatpush2.msra.mxu0 0.0
        %583 = vmatprep.subr.mxu0 0.0
        %584 = vmatpush2.msra.mxu0 0.0
        %585 = vmatprep.subr.mxu0 0.0
        %586 = vmatpush2.msra.mxu0 0.0
        %587 = vmatprep.subr.mxu0 0.0
        %588 = vmatpush2.msra.mxu0 0.0
        %589 = vmatprep.subr.mxu0 0.0
        %590 = vmatpush2.msra.mxu0 0.0
        %591 = vmatprep.subr.mxu0 0.0
        %592 = vmatpush2.msra.mxu0 0.0
        %593 = vmatprep.subr.mxu0 0.0
        %594 = vmatpush2.msra.mxu0 0.0
        %595 = vmatprep.subr.mxu0 0.0
        %596 = vmatpush2.msra.mxu0 0.0
        %597 = vmatprep.subr.mxu0 0.0
        %598 = vmatpush2.msra.mxu0 0.0
        %599 = vmatprep.subr.mxu0 0.0
        %600 = vmatpush2.msra.mxu0 0.0
        %601 = vmatprep.subr.mxu0 0.0
        %602 = vmatpush2.msra.mxu0 0.0
        %603 = vmatprep.subr.mxu0 0.0
        %604 = vmatpush2.msra.mxu0 0.0
        %605 = vmatprep.subr.mxu0 0.0
        %606 = vmatpush2.msra.mxu0 0.0
        %607 = vmatprep.subr.mxu0 0.0
        %608 = vmatpush2.msra.mxu0 0.0
        %609 = vmatprep.subr.mxu0 0.0
        %610 = vmatpush2.msra.mxu0 0.0
        %611 = vmatprep.subr.mxu0 0.0
        %612 = vmatpush2.msra.mxu0 0.0
        %613 = vmatprep.mubr.f32.mxu0 0.0
        %614 = vmatmul.mubr.f32.gmra.mxu0 %v547
        %v615 = vpop.f32.mrf.mxu0
        %v616 = vadd.f32 %v543, %v615
        %v617 = vpop.f32.mrf.mxu0
        %618 = vdwg.mxu0
        %v619 = vld [vmem:[#allocation10] sm:$0xff]
        %v620 = vld [vmem:[#allocation10 + $0x8] sm:$0xff]
        %v621 = vld [vmem:[#allocation10 + $0x10] sm:$0xff]
        %v622 = vld [vmem:[#allocation10 + $0x18] sm:$0xff]
        %v623 = vld [vmem:[%s6] sm:$0x1]
        %v625 = vlaneseq
        %v626 = vshrl.u32 %v625, 7
        %v627 = vsub.s32 0, %v626
        %v628 = vrot.slane %v623, %v627
        %v631 = vsel %vm545, %v532, 0
        %633 = vmatprep.subr.mxu0 0.0
        %634 = vmatpush1.msra.mxu0 0.0
        %635 = vmatprep.subr.mxu0 0.0
        %636 = vmatpush1.msra.mxu0 0.0
        %637 = vmatprep.subr.mxu0 0.0
        %638 = vmatpush1.msra.mxu0 0.0
        %639 = vmatprep.subr.mxu0 0.0
        %640 = vmatpush1.msra.mxu0 0.0
        %641 = vmatprep.subr.mxu0 0.0
        %642 = vmatpush1.msra.mxu0 0.0
        %643 = vmatprep.subr.mxu0 0.0
        %644 = vmatpush1.msra.mxu0 0.0
        %645 = vmatprep.subr.mxu0 0.0
        %646 = vmatpush1.msra.mxu0 0.0
        %647 = vmatprep.subr.mxu0 0.0
        %648 = vmatpush1.msra.mxu0 0.0
        %649 = vmatprep.subr.mxu0 0.0
        %650 = vmatpush1.msra.mxu0 0.0
        %651 = vmatprep.subr.mxu0 0.0
        %652 = vmatpush1.msra.mxu0 0.0
        %653 = vmatprep.subr.mxu0 0.0
        %654 = vmatpush1.msra.mxu0 0.0
        %655 = vmatprep.subr.mxu0 0.0
        %656 = vmatpush1.msra.mxu0 0.0
        %657 = vmatprep.subr.mxu0 0.0
        %658 = vmatpush1.msra.mxu0 %v622
        %659 = vmatprep.subr.mxu0 0.0
        %660 = vmatpush1.msra.mxu0 %v621
        %661 = vmatprep.subr.mxu0 0.0
        %662 = vmatpush1.msra.mxu0 %v620
        %663 = vmatprep.subr.mxu0 0.0
        %664 = vmatpush1.msra.mxu0 %v619
        %665 = vmatprep.subr.mxu0 0.0
        %666 = vmatpush2.msra.mxu0 0.0
        %667 = vmatprep.subr.mxu0 0.0
        %668 = vmatpush2.msra.mxu0 0.0
        %669 = vmatprep.subr.mxu0 0.0
        %670 = vmatpush2.msra.mxu0 0.0
        %671 = vmatprep.subr.mxu0 0.0
        %672 = vmatpush2.msra.mxu0 0.0
        %673 = vmatprep.subr.mxu0 0.0
        %674 = vmatpush2.msra.mxu0 0.0
        %675 = vmatprep.subr.mxu0 0.0
        %676 = vmatpush2.msra.mxu0 0.0
        %677 = vmatprep.subr.mxu0 0.0
        %678 = vmatpush2.msra.mxu0 0.0
        %679 = vmatprep.subr.mxu0 0.0
        %680 = vmatpush2.msra.mxu0 0.0
        %681 = vmatprep.subr.mxu0 0.0
        %682 = vmatpush2.msra.mxu0 0.0
        %683 = vmatprep.subr.mxu0 0.0
        %684 = vmatpush2.msra.mxu0 0.0
        %685 = vmatprep.subr.mxu0 0.0
        %686 = vmatpush2.msra.mxu0 0.0
        %687 = vmatprep.subr.mxu0 0.0
        %688 = vmatpush2.msra.mxu0 0.0
        %689 = vmatprep.subr.mxu0 0.0
        %690 = vmatpush2.msra.mxu0 0.0
        %691 = vmatprep.subr.mxu0 0.0
        %692 = vmatpush2.msra.mxu0 0.0
        %693 = vmatprep.subr.mxu0 0.0
        %694 = vmatpush2.msra.mxu0 0.0
        %695 = vmatprep.subr.mxu0 0.0
        %696 = vmatpush2.msra.mxu0 0.0
        %697 = vmatprep.mubr.f32.mxu0 0.0
        %698 = vmatmul.mubr.f32.gmra.mxu0 %v631
        %v699 = vpop.f32.mrf.mxu0
        %v700 = vadd.f32 %v628, %v699
        %v701 = vpop.f32.mrf.mxu0
        %702 = vdwg.mxu0
        %v703 = vld [vmem:[#allocation11] sm:$0xff]
        %v704 = vld [vmem:[#allocation11 + $0x8] sm:$0xff]
        %v705 = vld [vmem:[#allocation11 + $0x10] sm:$0xff]
        %v706 = vld [vmem:[#allocation11 + $0x18] sm:$0xff]
        %v707 = vld [vmem:[%s8] sm:$0x1]
        %v709 = vlaneseq
        %v710 = vshrl.u32 %v709, 7
        %v711 = vsub.s32 0, %v710
        %v712 = vrot.slane %v707, %v711
        %v715 = vsel %vm545, %v533, 0
        %717 = vmatprep.subr.mxu0 0.0
        %718 = vmatpush1.msra.mxu0 0.0
        %719 = vmatprep.subr.mxu0 0.0
        %720 = vmatpush1.msra.mxu0 0.0
        %721 = vmatprep.subr.mxu0 0.0
        %722 = vmatpush1.msra.mxu0 0.0
        %723 = vmatprep.subr.mxu0 0.0
        %724 = vmatpush1.msra.mxu0 0.0
        %725 = vmatprep.subr.mxu0 0.0
        %726 = vmatpush1.msra.mxu0 0.0
        %727 = vmatprep.subr.mxu0 0.0
        %728 = vmatpush1.msra.mxu0 0.0
        %729 = vmatprep.subr.mxu0 0.0
        %730 = vmatpush1.msra.mxu0 0.0
        %731 = vmatprep.subr.mxu0 0.0
        %732 = vmatpush1.msra.mxu0 0.0
        %733 = vmatprep.subr.mxu0 0.0
        %734 = vmatpush1.msra.mxu0 0.0
        %735 = vmatprep.subr.mxu0 0.0
        %736 = vmatpush1.msra.mxu0 0.0
        %737 = vmatprep.subr.mxu0 0.0
        %738 = vmatpush1.msra.mxu0 0.0
        %739 = vmatprep.subr.mxu0 0.0
        %740 = vmatpush1.msra.mxu0 0.0
        %741 = vmatprep.subr.mxu0 0.0
        %742 = vmatpush1.msra.mxu0 %v706
        %743 = vmatprep.subr.mxu0 0.0
        %744 = vmatpush1.msra.mxu0 %v705
        %745 = vmatprep.subr.mxu0 0.0
        %746 = vmatpush1.msra.mxu0 %v704
        %747 = vmatprep.subr.mxu0 0.0
        %748 = vmatpush1.msra.mxu0 %v703
        %749 = vmatprep.subr.mxu0 0.0
        %750 = vmatpush2.msra.mxu0 0.0
        %751 = vmatprep.subr.mxu0 0.0
        %752 = vmatpush2.msra.mxu0 0.0
        %753 = vmatprep.subr.mxu0 0.0
        %754 = vmatpush2.msra.mxu0 0.0
        %755 = vmatprep.subr.mxu0 0.0
        %756 = vmatpush2.msra.mxu0 0.0
        %757 = vmatprep.subr.mxu0 0.0
        %758 = vmatpush2.msra.mxu0 0.0
        %759 = vmatprep.subr.mxu0 0.0
        %760 = vmatpush2.msra.mxu0 0.0
        %761 = vmatprep.subr.mxu0 0.0
        %762 = vmatpush2.msra.mxu0 0.0
        %763 = vmatprep.subr.mxu0 0.0
        %764 = vmatpush2.msra.mxu0 0.0
        %765 = vmatprep.subr.mxu0 0.0
        %766 = vmatpush2.msra.mxu0 0.0
        %767 = vmatprep.subr.mxu0 0.0
        %768 = vmatpush2.msra.mxu0 0.0
        %769 = vmatprep.subr.mxu0 0.0
        %770 = vmatpush2.msra.mxu0 0.0
        %771 = vmatprep.subr.mxu0 0.0
        %772 = vmatpush2.msra.mxu0 0.0
        %773 = vmatprep.subr.mxu0 0.0
        %774 = vmatpush2.msra.mxu0 0.0
        %775 = vmatprep.subr.mxu0 0.0
        %776 = vmatpush2.msra.mxu0 0.0
        %777 = vmatprep.subr.mxu0 0.0
        %778 = vmatpush2.msra.mxu0 0.0
        %779 = vmatprep.subr.mxu0 0.0
        %780 = vmatpush2.msra.mxu0 0.0
        %781 = vmatprep.mubr.f32.mxu0 0.0
        %782 = vmatmul.mubr.f32.gmra.mxu0 %v715
        %v783 = vpop.f32.mrf.mxu0
        %v784 = vadd.f32 %v712, %v783
        %v785 = vpop.f32.mrf.mxu0
        %786 = vdwg.mxu0
        %v787 = vld [vmem:[#allocation13] sm:$0xff]
        %v788 = vld [vmem:[#allocation13 + $0x8] sm:$0xff]
        %v789 = vld [vmem:[#allocation13 + $0x10] sm:$0xff]
        %v790 = vld [vmem:[#allocation13 + $0x18] sm:$0xff]
        %v791 = vld [vmem:[%s10] sm:$0x1]
        %793 = vrot.lane.b32.xlu0 %v616, 120
        %v794 = vpop.permute.xlu0 %793
        %796 = vrot.lane.b32.xlu0 %v616, 112
        %v797 = vpop.permute.xlu0 %796
        %799 = vrot.lane.b32.xlu0 %v616, 104
        %v800 = vpop.permute.xlu0 %799
        %v802 = vcombine.low %v616, %v797
        %v803 = vcombine.high %v616, %v797
        %v805 = vunpack.c.l.s4 1983009808
        %v806 = vunpack.c.0.s8 %v805
        %v807 = vlaneseq
        %v808 = vshrl.u32 %v807, 7
        %v809 = vsub.s32 %v806, %v808
        %v810 = vrot.slane %v802, %v809
        %v812 = vunpack.c.l.s4 1983009808
        %v813 = vunpack.c.0.s8 %v812
        %v814 = vlaneseq
        %v815 = vshrl.u32 %v814, 7
        %v816 = vsub.s32 %v813, %v815
        %v817 = vrot.slane %v803, %v816
        %v818 = vcombine.low %v794, %v800
        %v819 = vcombine.high %v794, %v800
        %v821 = vunpack.c.l.s4 1983009808
        %v822 = vunpack.c.0.s8 %v821
        %v823 = vlaneseq
        %v824 = vshrl.u32 %v823, 7
        %v825 = vsub.s32 %v822, %v824
        %v826 = vrot.slane %v818, %v825
        %v828 = vunpack.c.l.s4 1983009808
        %v829 = vunpack.c.0.s8 %v828
        %v830 = vlaneseq
        %v831 = vshrl.u32 %v830, 7
        %v832 = vsub.s32 %v829, %v831
        %v833 = vrot.slane %v819, %v832
        %v834 = vcombine.low %v810, %v826
        %v835 = vcombine.high %v810, %v826
        %v837 = vunpack.c.l.s4 1934713408
        %v838 = vunpack.c.0.s8 %v837
        %v839 = vlaneseq
        %v840 = vshrl.u32 %v839, 7
        %v841 = vsub.s32 %v838, %v840
        %v842 = vrot.slane %v834, %v841
        %v844 = vunpack.c.l.s4 1934713408
        %v845 = vunpack.c.0.s8 %v844
        %v846 = vlaneseq
        %v847 = vshrl.u32 %v846, 7
        %v848 = vsub.s32 %v845, %v847
        %v849 = vrot.slane %v835, %v848
        %v850 = vcombine.low %v817, %v833
        %v851 = vcombine.high %v817, %v833
        %v853 = vunpack.c.l.s4 1934713408
        %v854 = vunpack.c.0.s8 %v853
        %v855 = vlaneseq
        %v856 = vshrl.u32 %v855, 7
        %v857 = vsub.s32 %v854, %v856
        %v858 = vrot.slane %v850, %v857
        %v860 = vunpack.c.l.s4 1934713408
        %v861 = vunpack.c.0.s8 %v860
        %v862 = vlaneseq
        %v863 = vshrl.u32 %v862, 7
        %v864 = vsub.s32 %v861, %v863
        %v865 = vrot.slane %v851, %v864
        %v866 = vcombine.high %v842, 0.0
        %v867 = vcombine.high %v849, 0.0
        %v868 = vcombine.high %v858, 0.0
        %v869 = vcombine.high %v865, 0.0
        %v870 = vcombine.low %v842, %v849
        %v872 = vunpack.c.l.s4 1983009808
        %v873 = vunpack.c.0.s8 %v872
        %v874 = vlaneseq
        %v875 = vshrl.u32 %v874, 7
        %v876 = vsub.s32 %v873, %v875
        %v877 = vrot.slane %v870, %v876
        %v878 = vcombine.low %v866, %v867
        %v880 = vunpack.c.l.s4 1983009808
        %v881 = vunpack.c.0.s8 %v880
        %v882 = vlaneseq
        %v883 = vshrl.u32 %v882, 7
        %v884 = vsub.s32 %v881, %v883
        %v885 = vrot.slane %v878, %v884
        %v886 = vcombine.low %v858, %v865
        %v888 = vunpack.c.l.s4 1983009808
        %v889 = vunpack.c.0.s8 %v888
        %v890 = vlaneseq
        %v891 = vshrl.u32 %v890, 7
        %v892 = vsub.s32 %v889, %v891
        %v893 = vrot.slane %v886, %v892
        %v894 = vcombine.low %v868, %v869
        %v896 = vunpack.c.l.s4 1983009808
        %v897 = vunpack.c.0.s8 %v896
        %v898 = vlaneseq
        %v899 = vshrl.u32 %v898, 7
        %v900 = vsub.s32 %v897, %v899
        %v901 = vrot.slane %v894, %v900
        %v902 = vcombine.low %v877, %v885
        %v903 = vcombine.high %v877, %v885
        %v905 = vunpack.c.l.s4 1934713408
        %v906 = vunpack.c.0.s8 %v905
        %v907 = vlaneseq
        %v908 = vshrl.u32 %v907, 7
        %v909 = vsub.s32 %v906, %v908
        %v910 = vrot.slane %v902, %v909
        %v912 = vunpack.c.l.s4 1934713408
        %v913 = vunpack.c.0.s8 %v912
        %v914 = vlaneseq
        %v915 = vshrl.u32 %v914, 7
        %v916 = vsub.s32 %v913, %v915
        %v917 = vrot.slane %v903, %v916
        %v918 = vcombine.low %v893, %v901
        %v919 = vcombine.high %v893, %v901
        %v921 = vunpack.c.l.s4 1934713408
        %v922 = vunpack.c.0.s8 %v921
        %v923 = vlaneseq
        %v924 = vshrl.u32 %v923, 7
        %v925 = vsub.s32 %v922, %v924
        %v926 = vrot.slane %v918, %v925
        %v928 = vunpack.c.l.s4 1934713408
        %v929 = vunpack.c.0.s8 %v928
        %v930 = vlaneseq
        %v931 = vshrl.u32 %v930, 7
        %v932 = vsub.s32 %v929, %v931
        %v933 = vrot.slane %v919, %v932
        %v934 = vcombine.low %v910, %v926
        %v935 = vcombine.high %v910, %v926
        %v936 = vcombine.low %v917, %v933
        %v937 = vcombine.high %v917, %v933
        %939 = vrot.lane.b32.xlu0 %v700, 120
        %v940 = vpop.permute.xlu0 %939
        %942 = vrot.lane.b32.xlu0 %v700, 112
        %v943 = vpop.permute.xlu0 %942
        %945 = vrot.lane.b32.xlu0 %v700, 104
        %v946 = vpop.permute.xlu0 %945
        %v948 = vcombine.low %v700, %v943
        %v949 = vcombine.high %v700, %v943
        %v951 = vunpack.c.l.s4 1983009808
        %v952 = vunpack.c.0.s8 %v951
        %v953 = vlaneseq
        %v954 = vshrl.u32 %v953, 7
        %v955 = vsub.s32 %v952, %v954
        %v956 = vrot.slane %v948, %v955
        %v958 = vunpack.c.l.s4 1983009808
        %v959 = vunpack.c.0.s8 %v958
        %v960 = vlaneseq
        %v961 = vshrl.u32 %v960, 7
        %v962 = vsub.s32 %v959, %v961
        %v963 = vrot.slane %v949, %v962
        %v964 = vcombine.low %v940, %v946
        %v965 = vcombine.high %v940, %v946
        %v967 = vunpack.c.l.s4 1983009808
        %v968 = vunpack.c.0.s8 %v967
        %v969 = vlaneseq
        %v970 = vshrl.u32 %v969, 7
        %v971 = vsub.s32 %v968, %v970
        %v972 = vrot.slane %v964, %v971
        %v974 = vunpack.c.l.s4 1983009808
        %v975 = vunpack.c.0.s8 %v974
        %v976 = vlaneseq
        %v977 = vshrl.u32 %v976, 7
        %v978 = vsub.s32 %v975, %v977
        %v979 = vrot.slane %v965, %v978
        %v980 = vcombine.low %v956, %v972
        %v981 = vcombine.high %v956, %v972
        %v983 = vunpack.c.l.s4 1934713408
        %v984 = vunpack.c.0.s8 %v983
        %v985 = vlaneseq
        %v986 = vshrl.u32 %v985, 7
        %v987 = vsub.s32 %v984, %v986
        %v988 = vrot.slane %v980, %v987
        %v990 = vunpack.c.l.s4 1934713408
        %v991 = vunpack.c.0.s8 %v990
        %v992 = vlaneseq
        %v993 = vshrl.u32 %v992, 7
        %v994 = vsub.s32 %v991, %v993
        %v995 = vrot.slane %v981, %v994
        %v996 = vcombine.low %v963, %v979
        %v997 = vcombine.high %v963, %v979
        %v999 = vunpack.c.l.s4 1934713408
        %v1000 = vunpack.c.0.s8 %v999
        %v1001 = vlaneseq
        %v1002 = vshrl.u32 %v1001, 7
        %v1003 = vsub.s32 %v1000, %v1002
        %v1004 = vrot.slane %v996, %v1003
        %v1006 = vunpack.c.l.s4 1934713408
        %v1007 = vunpack.c.0.s8 %v1006
        %v1008 = vlaneseq
        %v1009 = vshrl.u32 %v1008, 7
        %v1010 = vsub.s32 %v1007, %v1009
        %v1011 = vrot.slane %v997, %v1010
        %v1012 = vcombine.high %v988, 0.0
        %v1013 = vcombine.high %v995, 0.0
        %v1014 = vcombine.high %v1004, 0.0
        %v1015 = vcombine.high %v1011, 0.0
        %v1016 = vcombine.low %v988, %v995
        %v1018 = vunpack.c.l.s4 1983009808
        %v1019 = vunpack.c.0.s8 %v1018
        %v1020 = vlaneseq
        %v1021 = vshrl.u32 %v1020, 7
        %v1022 = vsub.s32 %v1019, %v1021
        %v1023 = vrot.slane %v1016, %v1022
        %v1024 = vcombine.low %v1012, %v1013
        %v1026 = vunpack.c.l.s4 1983009808
        %v1027 = vunpack.c.0.s8 %v1026
        %v1028 = vlaneseq
        %v1029 = vshrl.u32 %v1028, 7
        %v1030 = vsub.s32 %v1027, %v1029
        %v1031 = vrot.slane %v1024, %v1030
        %v1032 = vcombine.low %v1004, %v1011
        %v1034 = vunpack.c.l.s4 1983009808
        %v1035 = vunpack.c.0.s8 %v1034
        %v1036 = vlaneseq
        %v1037 = vshrl.u32 %v1036, 7
        %v1038 = vsub.s32 %v1035, %v1037
        %v1039 = vrot.slane %v1032, %v1038
        %v1040 = vcombine.low %v1014, %v1015
        %v1042 = vunpack.c.l.s4 1983009808
        %v1043 = vunpack.c.0.s8 %v1042
        %v1044 = vlaneseq
        %v1045 = vshrl.u32 %v1044, 7
        %v1046 = vsub.s32 %v1043, %v1045
        %v1047 = vrot.slane %v1040, %v1046
        %v1048 = vcombine.low %v1023, %v1031
        %v1049 = vcombine.high %v1023, %v1031
        %v1051 = vunpack.c.l.s4 1934713408
        %v1052 = vunpack.c.0.s8 %v1051
        %v1053 = vlaneseq
        %v1054 = vshrl.u32 %v1053, 7
        %v1055 = vsub.s32 %v1052, %v1054
        %v1056 = vrot.slane %v1048, %v1055
        %v1058 = vunpack.c.l.s4 1934713408
        %v1059 = vunpack.c.0.s8 %v1058
        %v1060 = vlaneseq
        %v1061 = vshrl.u32 %v1060, 7
        %v1062 = vsub.s32 %v1059, %v1061
        %v1063 = vrot.slane %v1049, %v1062
        %v1064 = vcombine.low %v1039, %v1047
        %v1065 = vcombine.high %v1039, %v1047
        %v1067 = vunpack.c.l.s4 1934713408
        %v1068 = vunpack.c.0.s8 %v1067
        %v1069 = vlaneseq
        %v1070 = vshrl.u32 %v1069, 7
        %v1071 = vsub.s32 %v1068, %v1070
        %v1072 = vrot.slane %v1064, %v1071
        %v1074 = vunpack.c.l.s4 1934713408
        %v1075 = vunpack.c.0.s8 %v1074
        %v1076 = vlaneseq
        %v1077 = vshrl.u32 %v1076, 7
        %v1078 = vsub.s32 %v1075, %v1077
        %v1079 = vrot.slane %v1065, %v1078
        %v1080 = vcombine.low %v1056, %v1072
        %v1081 = vcombine.high %v1056, %v1072
        %v1082 = vcombine.low %v1063, %v1079
        %v1083 = vcombine.high %v1063, %v1079
        %1085 = vrot.lane.b32.xlu0 %v784, 120
        %v1086 = vpop.permute.xlu0 %1085
        %1088 = vrot.lane.b32.xlu0 %v784, 112
        %v1089 = vpop.permute.xlu0 %1088
        %1091 = vrot.lane.b32.xlu0 %v784, 104
        %v1092 = vpop.permute.xlu0 %1091
        %v1094 = vcombine.low %v784, %v1089
        %v1095 = vcombine.high %v784, %v1089
        %v1097 = vunpack.c.l.s4 1983009808
        %v1098 = vunpack.c.0.s8 %v1097
        %v1099 = vlaneseq
        %v1100 = vshrl.u32 %v1099, 7
        %v1101 = vsub.s32 %v1098, %v1100
        %v1102 = vrot.slane %v1094, %v1101
        %v1104 = vunpack.c.l.s4 1983009808
        %v1105 = vunpack.c.0.s8 %v1104
        %v1106 = vlaneseq
        %v1107 = vshrl.u32 %v1106, 7
        %v1108 = vsub.s32 %v1105, %v1107
        %v1109 = vrot.slane %v1095, %v1108
        %v1110 = vcombine.low %v1086, %v1092
        %v1111 = vcombine.high %v1086, %v1092
        %v1113 = vunpack.c.l.s4 1983009808
        %v1114 = vunpack.c.0.s8 %v1113
        %v1115 = vlaneseq
        %v1116 = vshrl.u32 %v1115, 7
        %v1117 = vsub.s32 %v1114, %v1116
        %v1118 = vrot.slane %v1110, %v1117
        %v1120 = vunpack.c.l.s4 1983009808
        %v1121 = vunpack.c.0.s8 %v1120
        %v1122 = vlaneseq
        %v1123 = vshrl.u32 %v1122, 7
        %v1124 = vsub.s32 %v1121, %v1123
        %v1125 = vrot.slane %v1111, %v1124
        %v1126 = vcombine.low %v1102, %v1118
        %v1127 = vcombine.high %v1102, %v1118
        %v1129 = vunpack.c.l.s4 1934713408
        %v1130 = vunpack.c.0.s8 %v1129
        %v1131 = vlaneseq
        %v1132 = vshrl.u32 %v1131, 7
        %v1133 = vsub.s32 %v1130, %v1132
        %v1134 = vrot.slane %v1126, %v1133
        %v1136 = vunpack.c.l.s4 1934713408
        %v1137 = vunpack.c.0.s8 %v1136
        %v1138 = vlaneseq
        %v1139 = vshrl.u32 %v1138, 7
        %v1140 = vsub.s32 %v1137, %v1139
        %v1141 = vrot.slane %v1127, %v1140
        %v1142 = vcombine.low %v1109, %v1125
        %v1143 = vcombine.high %v1109, %v1125
        %v1145 = vunpack.c.l.s4 1934713408
        %v1146 = vunpack.c.0.s8 %v1145
        %v1147 = vlaneseq
        %v1148 = vshrl.u32 %v1147, 7
        %v1149 = vsub.s32 %v1146, %v1148
        %v1150 = vrot.slane %v1142, %v1149
        %v1152 = vunpack.c.l.s4 1934713408
        %v1153 = vunpack.c.0.s8 %v1152
        %v1154 = vlaneseq
        %v1155 = vshrl.u32 %v1154, 7
        %v1156 = vsub.s32 %v1153, %v1155
        %v1157 = vrot.slane %v1143, %v1156
        %v1158 = vcombine.high %v1134, 0.0
        %v1159 = vcombine.high %v1141, 0.0
        %v1160 = vcombine.high %v1150, 0.0
        %v1161 = vcombine.high %v1157, 0.0
        %v1162 = vcombine.low %v1134, %v1141
        %v1164 = vunpack.c.l.s4 1983009808
        %v1165 = vunpack.c.0.s8 %v1164
        %v1166 = vlaneseq
        %v1167 = vshrl.u32 %v1166, 7
        %v1168 = vsub.s32 %v1165, %v1167
        %v1169 = vrot.slane %v1162, %v1168
        %v1170 = vcombine.low %v1158, %v1159
        %v1172 = vunpack.c.l.s4 1983009808
        %v1173 = vunpack.c.0.s8 %v1172
        %v1174 = vlaneseq
        %v1175 = vshrl.u32 %v1174, 7
        %v1176 = vsub.s32 %v1173, %v1175
        %v1177 = vrot.slane %v1170, %v1176
        %v1178 = vcombine.low %v1150, %v1157
        %v1180 = vunpack.c.l.s4 1983009808
        %v1181 = vunpack.c.0.s8 %v1180
        %v1182 = vlaneseq
        %v1183 = vshrl.u32 %v1182, 7
        %v1184 = vsub.s32 %v1181, %v1183
        %v1185 = vrot.slane %v1178, %v1184
        %v1186 = vcombine.low %v1160, %v1161
        %v1188 = vunpack.c.l.s4 1983009808
        %v1189 = vunpack.c.0.s8 %v1188
        %v1190 = vlaneseq
        %v1191 = vshrl.u32 %v1190, 7
        %v1192 = vsub.s32 %v1189, %v1191
        %v1193 = vrot.slane %v1186, %v1192
        %v1194 = vcombine.low %v1169, %v1177
        %v1195 = vcombine.high %v1169, %v1177
        %v1197 = vunpack.c.l.s4 1934713408
        %v1198 = vunpack.c.0.s8 %v1197
        %v1199 = vlaneseq
        %v1200 = vshrl.u32 %v1199, 7
        %v1201 = vsub.s32 %v1198, %v1200
        %v1202 = vrot.slane %v1194, %v1201
        %v1204 = vunpack.c.l.s4 1934713408
        %v1205 = vunpack.c.0.s8 %v1204
        %v1206 = vlaneseq
        %v1207 = vshrl.u32 %v1206, 7
        %v1208 = vsub.s32 %v1205, %v1207
        %v1209 = vrot.slane %v1195, %v1208
        %v1210 = vcombine.low %v1185, %v1193
        %v1211 = vcombine.high %v1185, %v1193
        %v1213 = vunpack.c.l.s4 1934713408
        %v1214 = vunpack.c.0.s8 %v1213
        %v1215 = vlaneseq
        %v1216 = vshrl.u32 %v1215, 7
        %v1217 = vsub.s32 %v1214, %v1216
        %v1218 = vrot.slane %v1210, %v1217
        %v1220 = vunpack.c.l.s4 1934713408
        %v1221 = vunpack.c.0.s8 %v1220
        %v1222 = vlaneseq
        %v1223 = vshrl.u32 %v1222, 7
        %v1224 = vsub.s32 %v1221, %v1223
        %v1225 = vrot.slane %v1211, %v1224
        %v1226 = vcombine.low %v1202, %v1218
        %v1227 = vcombine.high %v1202, %v1218
        %v1228 = vcombine.low %v1209, %v1225
        %v1229 = vcombine.high %v1209, %v1225
        %vm1230 = vcmask 64512
        %v1232 = vsel %vm1230, %v934, 0
        %v1235 = vsel %vm1230, %v1080, 0
        %1237 = vmatprep.subr.mxu0 0.0
        %1238 = vmatpush1.xpose.msra.mxu0 0.0
        %1239 = vmatprep.subr.mxu0 0.0
        %1240 = vmatpush1.xpose.msra.mxu0 0.0
        %1241 = vmatprep.subr.mxu0 0.0
        %1242 = vmatpush1.xpose.msra.mxu0 0.0
        %1243 = vmatprep.subr.mxu0 0.0
        %1244 = vmatpush1.xpose.msra.mxu0 0.0
        %1245 = vmatprep.subr.mxu0 0.0
        %1246 = vmatpush1.xpose.msra.mxu0 0.0
        %1247 = vmatprep.subr.mxu0 0.0
        %1248 = vmatpush1.xpose.msra.mxu0 0.0
        %1249 = vmatprep.subr.mxu0 0.0
        %1250 = vmatpush1.xpose.msra.mxu0 0.0
        %1251 = vmatprep.subr.mxu0 0.0
        %1252 = vmatpush1.xpose.msra.mxu0 0.0
        %1253 = vmatprep.subr.mxu0 0.0
        %1254 = vmatpush1.xpose.msra.mxu0 0.0
        %1255 = vmatprep.subr.mxu0 0.0
        %1256 = vmatpush1.xpose.msra.mxu0 0.0
        %1257 = vmatprep.subr.mxu0 0.0
        %1258 = vmatpush1.xpose.msra.mxu0 0.0
        %1259 = vmatprep.subr.mxu0 0.0
        %1260 = vmatpush1.xpose.msra.mxu0 0.0
        %1261 = vmatprep.subr.mxu0 0.0
        %1262 = vmatpush1.xpose.msra.mxu0 0.0
        %1263 = vmatprep.subr.mxu0 0.0
        %1264 = vmatpush1.xpose.msra.mxu0 0.0
        %1265 = vmatprep.subr.mxu0 0.0
        %1266 = vmatpush1.xpose.msra.mxu0 0.0
        %1267 = vmatprep.subr.mxu0 0.0
        %1268 = vmatpush1.xpose.msra.mxu0 %v1235
        %1269 = vmatprep.subr.mxu0 0.0
        %1270 = vmatpush2.xpose.msra.mxu0 0.0
        %1271 = vmatprep.subr.mxu0 0.0
        %1272 = vmatpush2.xpose.msra.mxu0 0.0
        %1273 = vmatprep.subr.mxu0 0.0
        %1274 = vmatpush2.xpose.msra.mxu0 0.0
        %1275 = vmatprep.subr.mxu0 0.0
        %1276 = vmatpush2.xpose.msra.mxu0 0.0
        %1277 = vmatprep.subr.mxu0 0.0
        %1278 = vmatpush2.xpose.msra.mxu0 0.0
        %1279 = vmatprep.subr.mxu0 0.0
        %1280 = vmatpush2.xpose.msra.mxu0 0.0
        %1281 = vmatprep.subr.mxu0 0.0
        %1282 = vmatpush2.xpose.msra.mxu0 0.0
        %1283 = vmatprep.subr.mxu0 0.0
        %1284 = vmatpush2.xpose.msra.mxu0 0.0
        %1285 = vmatprep.subr.mxu0 0.0
        %1286 = vmatpush2.xpose.msra.mxu0 0.0
        %1287 = vmatprep.subr.mxu0 0.0
        %1288 = vmatpush2.xpose.msra.mxu0 0.0
        %1289 = vmatprep.subr.mxu0 0.0
        %1290 = vmatpush2.xpose.msra.mxu0 0.0
        %1291 = vmatprep.subr.mxu0 0.0
        %1292 = vmatpush2.xpose.msra.mxu0 0.0
        %1293 = vmatprep.subr.mxu0 0.0
        %1294 = vmatpush2.xpose.msra.mxu0 0.0
        %1295 = vmatprep.subr.mxu0 0.0
        %1296 = vmatpush2.xpose.msra.mxu0 0.0
        %1297 = vmatprep.subr.mxu0 0.0
        %1298 = vmatpush2.xpose.msra.mxu0 0.0
        %1299 = vmatprep.subr.mxu0 0.0
        %1300 = vmatpush2.xpose.msra.mxu0 0.0
        %1301 = vmatprep.mubr.f32.mxu0 0.0
        %1302 = vmatmul.mubr.f32.gmra.mxu0 %v1232
        %v1303 = vpop.f32.mrf.mxu0
        %v1304 = vadd.f32 0.0, %v1303
        %v1305 = vpop.f32.mrf.mxu0
        %1306 = vdwg.mxu0
        %v1308 = vsel %vm1230, %v935, 0
        %v1311 = vsel %vm1230, %v1081, 0
        %1313 = vmatprep.subr.mxu0 0.0
        %1314 = vmatpush1.xpose.msra.mxu0 0.0
        %1315 = vmatprep.subr.mxu0 0.0
        %1316 = vmatpush1.xpose.msra.mxu0 0.0
        %1317 = vmatprep.subr.mxu0 0.0
        %1318 = vmatpush1.xpose.msra.mxu0 0.0
        %1319 = vmatprep.subr.mxu0 0.0
        %1320 = vmatpush1.xpose.msra.mxu0 0.0
        %1321 = vmatprep.subr.mxu0 0.0
        %1322 = vmatpush1.xpose.msra.mxu0 0.0
        %1323 = vmatprep.subr.mxu0 0.0
        %1324 = vmatpush1.xpose.msra.mxu0 0.0
        %1325 = vmatprep.subr.mxu0 0.0
        %1326 = vmatpush1.xpose.msra.mxu0 0.0
        %1327 = vmatprep.subr.mxu0 0.0
        %1328 = vmatpush1.xpose.msra.mxu0 0.0
        %1329 = vmatprep.subr.mxu0 0.0
        %1330 = vmatpush1.xpose.msra.mxu0 0.0
        %1331 = vmatprep.subr.mxu0 0.0
        %1332 = vmatpush1.xpose.msra.mxu0 0.0
        %1333 = vmatprep.subr.mxu0 0.0
        %1334 = vmatpush1.xpose.msra.mxu0 0.0
        %1335 = vmatprep.subr.mxu0 0.0
        %1336 = vmatpush1.xpose.msra.mxu0 0.0
        %1337 = vmatprep.subr.mxu0 0.0
        %1338 = vmatpush1.xpose.msra.mxu0 0.0
        %1339 = vmatprep.subr.mxu0 0.0
        %1340 = vmatpush1.xpose.msra.mxu0 0.0
        %1341 = vmatprep.subr.mxu0 0.0
        %1342 = vmatpush1.xpose.msra.mxu0 0.0
        %1343 = vmatprep.subr.mxu0 0.0
        %1344 = vmatpush1.xpose.msra.mxu0 %v1311
        %1345 = vmatprep.subr.mxu0 0.0
        %1346 = vmatpush2.xpose.msra.mxu0 0.0
        %1347 = vmatprep.subr.mxu0 0.0
        %1348 = vmatpush2.xpose.msra.mxu0 0.0
        %1349 = vmatprep.subr.mxu0 0.0
        %1350 = vmatpush2.xpose.msra.mxu0 0.0
        %1351 = vmatprep.subr.mxu0 0.0
        %1352 = vmatpush2.xpose.msra.mxu0 0.0
        %1353 = vmatprep.subr.mxu0 0.0
        %1354 = vmatpush2.xpose.msra.mxu0 0.0
        %1355 = vmatprep.subr.mxu0 0.0
        %1356 = vmatpush2.xpose.msra.mxu0 0.0
        %1357 = vmatprep.subr.mxu0 0.0
        %1358 = vmatpush2.xpose.msra.mxu0 0.0
        %1359 = vmatprep.subr.mxu0 0.0
        %1360 = vmatpush2.xpose.msra.mxu0 0.0
        %1361 = vmatprep.subr.mxu0 0.0
        %1362 = vmatpush2.xpose.msra.mxu0 0.0
        %1363 = vmatprep.subr.mxu0 0.0
        %1364 = vmatpush2.xpose.msra.mxu0 0.0
        %1365 = vmatprep.subr.mxu0 0.0
        %1366 = vmatpush2.xpose.msra.mxu0 0.0
        %1367 = vmatprep.subr.mxu0 0.0
        %1368 = vmatpush2.xpose.msra.mxu0 0.0
        %1369 = vmatprep.subr.mxu0 0.0
        %1370 = vmatpush2.xpose.msra.mxu0 0.0
        %1371 = vmatprep.subr.mxu0 0.0
        %1372 = vmatpush2.xpose.msra.mxu0 0.0
        %1373 = vmatprep.subr.mxu0 0.0
        %1374 = vmatpush2.xpose.msra.mxu0 0.0
        %1375 = vmatprep.subr.mxu0 0.0
        %1376 = vmatpush2.xpose.msra.mxu0 0.0
        %1377 = vmatprep.mubr.f32.mxu0 0.0
        %1378 = vmatmul.mubr.f32.gmra.mxu0 %v1308
        %v1379 = vpop.f32.mrf.mxu0
        %v1380 = vadd.f32 0.0, %v1379
        %v1381 = vpop.f32.mrf.mxu0
        %1382 = vdwg.mxu0
        %v1384 = vsel %vm1230, %v936, 0
        %v1387 = vsel %vm1230, %v1082, 0
        %1389 = vmatprep.subr.mxu0 0.0
        %1390 = vmatpush1.xpose.msra.mxu0 0.0
        %1391 = vmatprep.subr.mxu0 0.0
        %1392 = vmatpush1.xpose.msra.mxu0 0.0
        %1393 = vmatprep.subr.mxu0 0.0
        %1394 = vmatpush1.xpose.msra.mxu0 0.0
        %1395 = vmatprep.subr.mxu0 0.0
        %1396 = vmatpush1.xpose.msra.mxu0 0.0
        %1397 = vmatprep.subr.mxu0 0.0
        %1398 = vmatpush1.xpose.msra.mxu0 0.0
        %1399 = vmatprep.subr.mxu0 0.0
        %1400 = vmatpush1.xpose.msra.mxu0 0.0
        %1401 = vmatprep.subr.mxu0 0.0
        %1402 = vmatpush1.xpose.msra.mxu0 0.0
        %1403 = vmatprep.subr.mxu0 0.0
        %1404 = vmatpush1.xpose.msra.mxu0 0.0
        %1405 = vmatprep.subr.mxu0 0.0
        %1406 = vmatpush1.xpose.msra.mxu0 0.0
        %1407 = vmatprep.subr.mxu0 0.0
        %1408 = vmatpush1.xpose.msra.mxu0 0.0
        %1409 = vmatprep.subr.mxu0 0.0
        %1410 = vmatpush1.xpose.msra.mxu0 0.0
        %1411 = vmatprep.subr.mxu0 0.0
        %1412 = vmatpush1.xpose.msra.mxu0 0.0
        %1413 = vmatprep.subr.mxu0 0.0
        %1414 = vmatpush1.xpose.msra.mxu0 0.0
        %1415 = vmatprep.subr.mxu0 0.0
        %1416 = vmatpush1.xpose.msra.mxu0 0.0
        %1417 = vmatprep.subr.mxu0 0.0
        %1418 = vmatpush1.xpose.msra.mxu0 0.0
        %1419 = vmatprep.subr.mxu0 0.0
        %1420 = vmatpush1.xpose.msra.mxu0 %v1387
        %1421 = vmatprep.subr.mxu0 0.0
        %1422 = vmatpush2.xpose.msra.mxu0 0.0
        %1423 = vmatprep.subr.mxu0 0.0
        %1424 = vmatpush2.xpose.msra.mxu0 0.0
        %1425 = vmatprep.subr.mxu0 0.0
        %1426 = vmatpush2.xpose.msra.mxu0 0.0
        %1427 = vmatprep.subr.mxu0 0.0
        %1428 = vmatpush2.xpose.msra.mxu0 0.0
        %1429 = vmatprep.subr.mxu0 0.0
        %1430 = vmatpush2.xpose.msra.mxu0 0.0
        %1431 = vmatprep.subr.mxu0 0.0
        %1432 = vmatpush2.xpose.msra.mxu0 0.0
        %1433 = vmatprep.subr.mxu0 0.0
        %1434 = vmatpush2.xpose.msra.mxu0 0.0
        %1435 = vmatprep.subr.mxu0 0.0
        %1436 = vmatpush2.xpose.msra.mxu0 0.0
        %1437 = vmatprep.subr.mxu0 0.0
        %1438 = vmatpush2.xpose.msra.mxu0 0.0
        %1439 = vmatprep.subr.mxu0 0.0
        %1440 = vmatpush2.xpose.msra.mxu0 0.0
        %1441 = vmatprep.subr.mxu0 0.0
        %1442 = vmatpush2.xpose.msra.mxu0 0.0
        %1443 = vmatprep.subr.mxu0 0.0
        %1444 = vmatpush2.xpose.msra.mxu0 0.0
        %1445 = vmatprep.subr.mxu0 0.0
        %1446 = vmatpush2.xpose.msra.mxu0 0.0
        %1447 = vmatprep.subr.mxu0 0.0
        %1448 = vmatpush2.xpose.msra.mxu0 0.0
        %1449 = vmatprep.subr.mxu0 0.0
        %1450 = vmatpush2.xpose.msra.mxu0 0.0
        %1451 = vmatprep.subr.mxu0 0.0
        %1452 = vmatpush2.xpose.msra.mxu0 0.0
        %1453 = vmatprep.mubr.f32.mxu0 0.0
        %1454 = vmatmul.mubr.f32.gmra.mxu0 %v1384
        %v1455 = vpop.f32.mrf.mxu0
        %v1456 = vadd.f32 0.0, %v1455
        %v1457 = vpop.f32.mrf.mxu0
        %1458 = vdwg.mxu0
        %v1460 = vsel %vm1230, %v937, 0
        %v1463 = vsel %vm1230, %v1083, 0
        %1465 = vmatprep.subr.mxu0 0.0
        %1466 = vmatpush1.xpose.msra.mxu0 0.0
        %1467 = vmatprep.subr.mxu0 0.0
        %1468 = vmatpush1.xpose.msra.mxu0 0.0
        %1469 = vmatprep.subr.mxu0 0.0
        %1470 = vmatpush1.xpose.msra.mxu0 0.0
        %1471 = vmatprep.subr.mxu0 0.0
        %1472 = vmatpush1.xpose.msra.mxu0 0.0
        %1473 = vmatprep.subr.mxu0 0.0
        %1474 = vmatpush1.xpose.msra.mxu0 0.0
        %1475 = vmatprep.subr.mxu0 0.0
        %1476 = vmatpush1.xpose.msra.mxu0 0.0
        %1477 = vmatprep.subr.mxu0 0.0
        %1478 = vmatpush1.xpose.msra.mxu0 0.0
        %1479 = vmatprep.subr.mxu0 0.0
        %1480 = vmatpush1.xpose.msra.mxu0 0.0
        %1481 = vmatprep.subr.mxu0 0.0
        %1482 = vmatpush1.xpose.msra.mxu0 0.0
        %1483 = vmatprep.subr.mxu0 0.0
        %1484 = vmatpush1.xpose.msra.mxu0 0.0
        %1485 = vmatprep.subr.mxu0 0.0
        %1486 = vmatpush1.xpose.msra.mxu0 0.0
        %1487 = vmatprep.subr.mxu0 0.0
        %1488 = vmatpush1.xpose.msra.mxu0 0.0
        %1489 = vmatprep.subr.mxu0 0.0
        %1490 = vmatpush1.xpose.msra.mxu0 0.0
        %1491 = vmatprep.subr.mxu0 0.0
        %1492 = vmatpush1.xpose.msra.mxu0 0.0
        %1493 = vmatprep.subr.mxu0 0.0
        %1494 = vmatpush1.xpose.msra.mxu0 0.0
        %1495 = vmatprep.subr.mxu0 0.0
        %1496 = vmatpush1.xpose.msra.mxu0 %v1463
        %1497 = vmatprep.subr.mxu0 0.0
        %1498 = vmatpush2.xpose.msra.mxu0 0.0
        %1499 = vmatprep.subr.mxu0 0.0
        %1500 = vmatpush2.xpose.msra.mxu0 0.0
        %1501 = vmatprep.subr.mxu0 0.0
        %1502 = vmatpush2.xpose.msra.mxu0 0.0
        %1503 = vmatprep.subr.mxu0 0.0
        %1504 = vmatpush2.xpose.msra.mxu0 0.0
        %1505 = vmatprep.subr.mxu0 0.0
        %1506 = vmatpush2.xpose.msra.mxu0 0.0
        %1507 = vmatprep.subr.mxu0 0.0
        %1508 = vmatpush2.xpose.msra.mxu0 0.0
        %1509 = vmatprep.subr.mxu0 0.0
        %1510 = vmatpush2.xpose.msra.mxu0 0.0
        %1511 = vmatprep.subr.mxu0 0.0
        %1512 = vmatpush2.xpose.msra.mxu0 0.0
        %1513 = vmatprep.subr.mxu0 0.0
        %1514 = vmatpush2.xpose.msra.mxu0 0.0
        %1515 = vmatprep.subr.mxu0 0.0
        %1516 = vmatpush2.xpose.msra.mxu0 0.0
        %1517 = vmatprep.subr.mxu0 0.0
        %1518 = vmatpush2.xpose.msra.mxu0 0.0
        %1519 = vmatprep.subr.mxu0 0.0
        %1520 = vmatpush2.xpose.msra.mxu0 0.0
        %1521 = vmatprep.subr.mxu0 0.0
        %1522 = vmatpush2.xpose.msra.mxu0 0.0
        %1523 = vmatprep.subr.mxu0 0.0
        %1524 = vmatpush2.xpose.msra.mxu0 0.0
        %1525 = vmatprep.subr.mxu0 0.0
        %1526 = vmatpush2.xpose.msra.mxu0 0.0
        %1527 = vmatprep.subr.mxu0 0.0
        %1528 = vmatpush2.xpose.msra.mxu0 0.0
        %1529 = vmatprep.mubr.f32.mxu0 0.0
        %1530 = vmatmul.mubr.f32.gmra.mxu0 %v1460
        %v1531 = vpop.f32.mrf.mxu0
        %v1532 = vadd.f32 0.0, %v1531
        %v1533 = vpop.f32.mrf.mxu0
        %1534 = vdwg.mxu0
        %v1535 = vmul.f32 %v1304, 0.35355338
        %v1536 = vmul.f32 %v1380, 0.35355338
        %v1537 = vmul.f32 %v1456, 0.35355338
        %v1538 = vmul.f32 %v1532, 0.35355338
        %v1539 = vsel %vm1230, %v1535, -inf
        %1540 = vmax.xlane.f32.xlu0 %v1539
        %v1541 = vpop.xlane.xlu0 %1540
        %v1542 = vsel %vm1230, %v1536, -inf
        %1543 = vmax.xlane.f32.xlu0 %v1542
        %v1544 = vpop.xlane.xlu0 %1543
        %v1545 = vsel %vm1230, %v1537, -inf
        %1546 = vmax.xlane.f32.xlu0 %v1545
        %v1547 = vpop.xlane.xlu0 %1546
        %v1548 = vsel %vm1230, %v1538, -inf
        %1549 = vmax.xlane.f32.xlu0 %v1548
        %v1550 = vpop.xlane.xlu0 %1549
        %v1551 = vsub.f32 %v1535, %v1541
        %v1552 = vsub.f32 %v1536, %v1544
        %v1553 = vsub.f32 %v1537, %v1547
        %v1554 = vsub.f32 %v1538, %v1550
        %v1555 = vmul.f32 %v1551, 1.442695
        %v1556 = vpow.pop %v1555
        %v1557 = vmul.f32 %v1552, 1.442695
        %v1558 = vpow.pop %v1557
        %v1559 = vmul.f32 %v1553, 1.442695
        %v1560 = vpow.pop %v1559
        %v1561 = vmul.f32 %v1554, 1.442695
        %v1562 = vpow.pop %v1561
        %v1563 = vsel %vm1230, %v1556, 0.0
        %1564 = vadd.xlane.f32.xlu0 %v1563
        %v1565 = vpop.xlane.xlu0 %1564
        %v1566 = vsel %vm1230, %v1558, 0.0
        %1567 = vadd.xlane.f32.xlu0 %v1566
        %v1568 = vpop.xlane.xlu0 %1567
        %v1569 = vsel %vm1230, %v1560, 0.0
        %1570 = vadd.xlane.f32.xlu0 %v1569
        %v1571 = vpop.xlane.xlu0 %1570
        %v1572 = vsel %vm1230, %v1562, 0.0
        %1573 = vadd.xlane.f32.xlu0 %v1572
        %v1574 = vpop.xlane.xlu0 %1573
        %v1575 = vrcp.pop %v1565
        %v1576 = vrcp.pop %v1568
        %v1577 = vrcp.pop %v1571
        %v1578 = vrcp.pop %v1574
        %v1579 = vmul.f32 %v1556, %v1575
        %v1580 = vmul.f32 %v1558, %v1576
        %v1581 = vmul.f32 %v1560, %v1577
        %v1582 = vmul.f32 %v1562, %v1578
        %v1584 = vsel %vm1230, %v1579, 0
        %1586 = vmatprep.subr.mxu0 0.0
        %1587 = vmatpush1.msra.mxu0 0.0
        %1588 = vmatprep.subr.mxu0 0.0
        %1589 = vmatpush1.msra.mxu0 0.0
        %1590 = vmatprep.subr.mxu0 0.0
        %1591 = vmatpush1.msra.mxu0 0.0
        %1592 = vmatprep.subr.mxu0 0.0
        %1593 = vmatpush1.msra.mxu0 0.0
        %1594 = vmatprep.subr.mxu0 0.0
        %1595 = vmatpush1.msra.mxu0 0.0
        %1596 = vmatprep.subr.mxu0 0.0
        %1597 = vmatpush1.msra.mxu0 0.0
        %1598 = vmatprep.subr.mxu0 0.0
        %1599 = vmatpush1.msra.mxu0 0.0
        %1600 = vmatprep.subr.mxu0 0.0
        %1601 = vmatpush1.msra.mxu0 0.0
        %1602 = vmatprep.subr.mxu0 0.0
        %1603 = vmatpush1.msra.mxu0 0.0
        %1604 = vmatprep.subr.mxu0 0.0
        %1605 = vmatpush1.msra.mxu0 0.0
        %1606 = vmatprep.subr.mxu0 0.0
        %1607 = vmatpush1.msra.mxu0 0.0
        %1608 = vmatprep.subr.mxu0 0.0
        %1609 = vmatpush1.msra.mxu0 0.0
        %1610 = vmatprep.subr.mxu0 0.0
        %1611 = vmatpush1.msra.mxu0 0.0
        %1612 = vmatprep.subr.mxu0 0.0
        %1613 = vmatpush1.msra.mxu0 0.0
        %1614 = vmatprep.subr.mxu0 0.0
        %1615 = vmatpush1.msra.mxu0 0.0
        %1616 = vmatprep.subr.mxu0 0.0
        %1617 = vmatpush1.msra.mxu0 %v1226
        %1618 = vmatprep.subr.mxu0 0.0
        %1619 = vmatpush2.msra.mxu0 0.0
        %1620 = vmatprep.subr.mxu0 0.0
        %1621 = vmatpush2.msra.mxu0 0.0
        %1622 = vmatprep.subr.mxu0 0.0
        %1623 = vmatpush2.msra.mxu0 0.0
        %1624 = vmatprep.subr.mxu0 0.0
        %1625 = vmatpush2.msra.mxu0 0.0
        %1626 = vmatprep.subr.mxu0 0.0
        %1627 = vmatpush2.msra.mxu0 0.0
        %1628 = vmatprep.subr.mxu0 0.0
        %1629 = vmatpush2.msra.mxu0 0.0
        %1630 = vmatprep.subr.mxu0 0.0
        %1631 = vmatpush2.msra.mxu0 0.0
        %1632 = vmatprep.subr.mxu0 0.0
        %1633 = vmatpush2.msra.mxu0 0.0
        %1634 = vmatprep.subr.mxu0 0.0
        %1635 = vmatpush2.msra.mxu0 0.0
        %1636 = vmatprep.subr.mxu0 0.0
        %1637 = vmatpush2.msra.mxu0 0.0
        %1638 = vmatprep.subr.mxu0 0.0
        %1639 = vmatpush2.msra.mxu0 0.0
        %1640 = vmatprep.subr.mxu0 0.0
        %1641 = vmatpush2.msra.mxu0 0.0
        %1642 = vmatprep.subr.mxu0 0.0
        %1643 = vmatpush2.msra.mxu0 0.0
        %1644 = vmatprep.subr.mxu0 0.0
        %1645 = vmatpush2.msra.mxu0 0.0
        %1646 = vmatprep.subr.mxu0 0.0
        %1647 = vmatpush2.msra.mxu0 0.0
        %1648 = vmatprep.subr.mxu0 0.0
        %1649 = vmatpush2.msra.mxu0 0.0
        %1650 = vmatprep.mubr.f32.mxu0 0.0
        %1651 = vmatmul.mubr.f32.gmra.mxu0 %v1584
        %v1652 = vpop.f32.mrf.mxu0
        %v1653 = vadd.f32 0.0, %v1652
        %v1654 = vpop.f32.mrf.mxu0
        %1655 = vdwg.mxu0
        %v1657 = vsel %vm1230, %v1580, 0
        %1659 = vmatprep.subr.mxu0 0.0
        %1660 = vmatpush1.msra.mxu0 0.0
        %1661 = vmatprep.subr.mxu0 0.0
        %1662 = vmatpush1.msra.mxu0 0.0
        %1663 = vmatprep.subr.mxu0 0.0
        %1664 = vmatpush1.msra.mxu0 0.0
        %1665 = vmatprep.subr.mxu0 0.0
        %1666 = vmatpush1.msra.mxu0 0.0
        %1667 = vmatprep.subr.mxu0 0.0
        %1668 = vmatpush1.msra.mxu0 0.0
        %1669 = vmatprep.subr.mxu0 0.0
        %1670 = vmatpush1.msra.mxu0 0.0
        %1671 = vmatprep.subr.mxu0 0.0
        %1672 = vmatpush1.msra.mxu0 0.0
        %1673 = vmatprep.subr.mxu0 0.0
        %1674 = vmatpush1.msra.mxu0 0.0
        %1675 = vmatprep.subr.mxu0 0.0
        %1676 = vmatpush1.msra.mxu0 0.0
        %1677 = vmatprep.subr.mxu0 0.0
        %1678 = vmatpush1.msra.mxu0 0.0
        %1679 = vmatprep.subr.mxu0 0.0
        %1680 = vmatpush1.msra.mxu0 0.0
        %1681 = vmatprep.subr.mxu0 0.0
        %1682 = vmatpush1.msra.mxu0 0.0
        %1683 = vmatprep.subr.mxu0 0.0
        %1684 = vmatpush1.msra.mxu0 0.0
        %1685 = vmatprep.subr.mxu0 0.0
        %1686 = vmatpush1.msra.mxu0 0.0
        %1687 = vmatprep.subr.mxu0 0.0
        %1688 = vmatpush1.msra.mxu0 0.0
        %1689 = vmatprep.subr.mxu0 0.0
        %1690 = vmatpush1.msra.mxu0 %v1227
        %1691 = vmatprep.subr.mxu0 0.0
        %1692 = vmatpush2.msra.mxu0 0.0
        %1693 = vmatprep.subr.mxu0 0.0
        %1694 = vmatpush2.msra.mxu0 0.0
        %1695 = vmatprep.subr.mxu0 0.0
        %1696 = vmatpush2.msra.mxu0 0.0
        %1697 = vmatprep.subr.mxu0 0.0
        %1698 = vmatpush2.msra.mxu0 0.0
        %1699 = vmatprep.subr.mxu0 0.0
        %1700 = vmatpush2.msra.mxu0 0.0
        %1701 = vmatprep.subr.mxu0 0.0
        %1702 = vmatpush2.msra.mxu0 0.0
        %1703 = vmatprep.subr.mxu0 0.0
        %1704 = vmatpush2.msra.mxu0 0.0
        %1705 = vmatprep.subr.mxu0 0.0
        %1706 = vmatpush2.msra.mxu0 0.0
        %1707 = vmatprep.subr.mxu0 0.0
        %1708 = vmatpush2.msra.mxu0 0.0
        %1709 = vmatprep.subr.mxu0 0.0
        %1710 = vmatpush2.msra.mxu0 0.0
        %1711 = vmatprep.subr.mxu0 0.0
        %1712 = vmatpush2.msra.mxu0 0.0
        %1713 = vmatprep.subr.mxu0 0.0
        %1714 = vmatpush2.msra.mxu0 0.0
        %1715 = vmatprep.subr.mxu0 0.0
        %1716 = vmatpush2.msra.mxu0 0.0
        %1717 = vmatprep.subr.mxu0 0.0
        %1718 = vmatpush2.msra.mxu0 0.0
        %1719 = vmatprep.subr.mxu0 0.0
        %1720 = vmatpush2.msra.mxu0 0.0
        %1721 = vmatprep.subr.mxu0 0.0
        %1722 = vmatpush2.msra.mxu0 0.0
        %1723 = vmatprep.mubr.f32.mxu0 0.0
        %1724 = vmatmul.mubr.f32.gmra.mxu0 %v1657
        %v1725 = vpop.f32.mrf.mxu0
        %v1726 = vadd.f32 0.0, %v1725
        %v1727 = vpop.f32.mrf.mxu0
        %1728 = vdwg.mxu0
        %v1730 = vsel %vm1230, %v1581, 0
        %1732 = vmatprep.subr.mxu0 0.0
        %1733 = vmatpush1.msra.mxu0 0.0
        %1734 = vmatprep.subr.mxu0 0.0
        %1735 = vmatpush1.msra.mxu0 0.0
        %1736 = vmatprep.subr.mxu0 0.0
        %1737 = vmatpush1.msra.mxu0 0.0
        %1738 = vmatprep.subr.mxu0 0.0
        %1739 = vmatpush1.msra.mxu0 0.0
        %1740 = vmatprep.subr.mxu0 0.0
        %1741 = vmatpush1.msra.mxu0 0.0
        %1742 = vmatprep.subr.mxu0 0.0
        %1743 = vmatpush1.msra.mxu0 0.0
        %1744 = vmatprep.subr.mxu0 0.0
        %1745 = vmatpush1.msra.mxu0 0.0
        %1746 = vmatprep.subr.mxu0 0.0
        %1747 = vmatpush1.msra.mxu0 0.0
        %1748 = vmatprep.subr.mxu0 0.0
        %1749 = vmatpush1.msra.mxu0 0.0
        %1750 = vmatprep.subr.mxu0 0.0
        %1751 = vmatpush1.msra.mxu0 0.0
        %1752 = vmatprep.subr.mxu0 0.0
        %1753 = vmatpush1.msra.mxu0 0.0
        %1754 = vmatprep.subr.mxu0 0.0
        %1755 = vmatpush1.msra.mxu0 0.0
        %1756 = vmatprep.subr.mxu0 0.0
        %1757 = vmatpush1.msra.mxu0 0.0
        %1758 = vmatprep.subr.mxu0 0.0
        %1759 = vmatpush1.msra.mxu0 0.0
        %1760 = vmatprep.subr.mxu0 0.0
        %1761 = vmatpush1.msra.mxu0 0.0
        %1762 = vmatprep.subr.mxu0 0.0
        %1763 = vmatpush1.msra.mxu0 %v1228
        %1764 = vmatprep.subr.mxu0 0.0
        %1765 = vmatpush2.msra.mxu0 0.0
        %1766 = vmatprep.subr.mxu0 0.0
        %1767 = vmatpush2.msra.mxu0 0.0
        %1768 = vmatprep.subr.mxu0 0.0
        %1769 = vmatpush2.msra.mxu0 0.0
        %1770 = vmatprep.subr.mxu0 0.0
        %1771 = vmatpush2.msra.mxu0 0.0
        %1772 = vmatprep.subr.mxu0 0.0
        %1773 = vmatpush2.msra.mxu0 0.0
        %1774 = vmatprep.subr.mxu0 0.0
        %1775 = vmatpush2.msra.mxu0 0.0
        %1776 = vmatprep.subr.mxu0 0.0
        %1777 = vmatpush2.msra.mxu0 0.0
        %1778 = vmatprep.subr.mxu0 0.0
        %1779 = vmatpush2.msra.mxu0 0.0
        %1780 = vmatprep.subr.mxu0 0.0
        %1781 = vmatpush2.msra.mxu0 0.0
        %1782 = vmatprep.subr.mxu0 0.0
        %1783 = vmatpush2.msra.mxu0 0.0
        %1784 = vmatprep.subr.mxu0 0.0
        %1785 = vmatpush2.msra.mxu0 0.0
        %1786 = vmatprep.subr.mxu0 0.0
        %1787 = vmatpush2.msra.mxu0 0.0
        %1788 = vmatprep.subr.mxu0 0.0
        %1789 = vmatpush2.msra.mxu0 0.0
        %1790 = vmatprep.subr.mxu0 0.0
        %1791 = vmatpush2.msra.mxu0 0.0
        %1792 = vmatprep.subr.mxu0 0.0
        %1793 = vmatpush2.msra.mxu0 0.0
        %1794 = vmatprep.subr.mxu0 0.0
        %1795 = vmatpush2.msra.mxu0 0.0
        %1796 = vmatprep.mubr.f32.mxu0 0.0
        %1797 = vmatmul.mubr.f32.gmra.mxu0 %v1730
        %v1798 = vpop.f32.mrf.mxu0
        %v1799 = vadd.f32 0.0, %v1798
        %v1800 = vpop.f32.mrf.mxu0
        %1801 = vdwg.mxu0
        %v1803 = vsel %vm1230, %v1582, 0
        %1805 = vmatprep.subr.mxu0 0.0
        %1806 = vmatpush1.msra.mxu0 0.0
        %1807 = vmatprep.subr.mxu0 0.0
        %1808 = vmatpush1.msra.mxu0 0.0
        %1809 = vmatprep.subr.mxu0 0.0
        %1810 = vmatpush1.msra.mxu0 0.0
        %1811 = vmatprep.subr.mxu0 0.0
        %1812 = vmatpush1.msra.mxu0 0.0
        %1813 = vmatprep.subr.mxu0 0.0
        %1814 = vmatpush1.msra.mxu0 0.0
        %1815 = vmatprep.subr.mxu0 0.0
        %1816 = vmatpush1.msra.mxu0 0.0
        %1817 = vmatprep.subr.mxu0 0.0
        %1818 = vmatpush1.msra.mxu0 0.0
        %1819 = vmatprep.subr.mxu0 0.0
        %1820 = vmatpush1.msra.mxu0 0.0
        %1821 = vmatprep.subr.mxu0 0.0
        %1822 = vmatpush1.msra.mxu0 0.0
        %1823 = vmatprep.subr.mxu0 0.0
        %1824 = vmatpush1.msra.mxu0 0.0
        %1825 = vmatprep.subr.mxu0 0.0
        %1826 = vmatpush1.msra.mxu0 0.0
        %1827 = vmatprep.subr.mxu0 0.0
        %1828 = vmatpush1.msra.mxu0 0.0
        %1829 = vmatprep.subr.mxu0 0.0
        %1830 = vmatpush1.msra.mxu0 0.0
        %1831 = vmatprep.subr.mxu0 0.0
        %1832 = vmatpush1.msra.mxu0 0.0
        %1833 = vmatprep.subr.mxu0 0.0
        %1834 = vmatpush1.msra.mxu0 0.0
        %1835 = vmatprep.subr.mxu0 0.0
        %1836 = vmatpush1.msra.mxu0 %v1229
        %1837 = vmatprep.subr.mxu0 0.0
        %1838 = vmatpush2.msra.mxu0 0.0
        %1839 = vmatprep.subr.mxu0 0.0
        %1840 = vmatpush2.msra.mxu0 0.0
        %1841 = vmatprep.subr.mxu0 0.0
        %1842 = vmatpush2.msra.mxu0 0.0
        %1843 = vmatprep.subr.mxu0 0.0
        %1844 = vmatpush2.msra.mxu0 0.0
        %1845 = vmatprep.subr.mxu0 0.0
        %1846 = vmatpush2.msra.mxu0 0.0
        %1847 = vmatprep.subr.mxu0 0.0
        %1848 = vmatpush2.msra.mxu0 0.0
        %1849 = vmatprep.subr.mxu0 0.0
        %1850 = vmatpush2.msra.mxu0 0.0
        %1851 = vmatprep.subr.mxu0 0.0
        %1852 = vmatpush2.msra.mxu0 0.0
        %1853 = vmatprep.subr.mxu0 0.0
        %1854 = vmatpush2.msra.mxu0 0.0
        %1855 = vmatprep.subr.mxu0 0.0
        %1856 = vmatpush2.msra.mxu0 0.0
        %1857 = vmatprep.subr.mxu0 0.0
        %1858 = vmatpush2.msra.mxu0 0.0
        %1859 = vmatprep.subr.mxu0 0.0
        %1860 = vmatpush2.msra.mxu0 0.0
        %1861 = vmatprep.subr.mxu0 0.0
        %1862 = vmatpush2.msra.mxu0 0.0
        %1863 = vmatprep.subr.mxu0 0.0
        %1864 = vmatpush2.msra.mxu0 0.0
        %1865 = vmatprep.subr.mxu0 0.0
        %1866 = vmatpush2.msra.mxu0 0.0
        %1867 = vmatprep.subr.mxu0 0.0
        %1868 = vmatpush2.msra.mxu0 0.0
        %1869 = vmatprep.mubr.f32.mxu0 0.0
        %1870 = vmatmul.mubr.f32.gmra.mxu0 %v1803
        %v1871 = vpop.f32.mrf.mxu0
        %v1872 = vadd.f32 0.0, %v1871
        %v1873 = vpop.f32.mrf.mxu0
        %1874 = vdwg.mxu0
        %v1875 = vcombine.low %v1653, %v1799
        %v1876 = vcombine.high %v1653, %v1799
        %v1878 = vunpack.c.l.s4 1983009808
        %v1879 = vunpack.c.0.s8 %v1878
        %v1880 = vlaneseq
        %v1881 = vshrl.u32 %v1880, 7
        %v1882 = vsub.s32 %v1879, %v1881
        %v1883 = vrot.slane %v1875, %v1882
        %v1885 = vunpack.c.l.s4 1983009808
        %v1886 = vunpack.c.0.s8 %v1885
        %v1887 = vlaneseq
        %v1888 = vshrl.u32 %v1887, 7
        %v1889 = vsub.s32 %v1886, %v1888
        %v1890 = vrot.slane %v1876, %v1889
        %v1891 = vcombine.low %v1726, %v1872
        %v1892 = vcombine.high %v1726, %v1872
        %v1894 = vunpack.c.l.s4 1983009808
        %v1895 = vunpack.c.0.s8 %v1894
        %v1896 = vlaneseq
        %v1897 = vshrl.u32 %v1896, 7
        %v1898 = vsub.s32 %v1895, %v1897
        %v1899 = vrot.slane %v1891, %v1898
        %v1901 = vunpack.c.l.s4 1983009808
        %v1902 = vunpack.c.0.s8 %v1901
        %v1903 = vlaneseq
        %v1904 = vshrl.u32 %v1903, 7
        %v1905 = vsub.s32 %v1902, %v1904
        %v1906 = vrot.slane %v1892, %v1905
        %v1907 = vcombine.low %v1883, %v1899
        %v1908 = vcombine.high %v1883, %v1899
        %v1910 = vunpack.c.l.s4 1934713408
        %v1911 = vunpack.c.0.s8 %v1910
        %v1912 = vlaneseq
        %v1913 = vshrl.u32 %v1912, 7
        %v1914 = vsub.s32 %v1911, %v1913
        %v1915 = vrot.slane %v1907, %v1914
        %v1917 = vunpack.c.l.s4 1934713408
        %v1918 = vunpack.c.0.s8 %v1917
        %v1919 = vlaneseq
        %v1920 = vshrl.u32 %v1919, 7
        %v1921 = vsub.s32 %v1918, %v1920
        %v1922 = vrot.slane %v1908, %v1921
        %v1923 = vcombine.low %v1890, %v1906
        %v1924 = vcombine.high %v1890, %v1906
        %v1926 = vunpack.c.l.s4 1934713408
        %v1927 = vunpack.c.0.s8 %v1926
        %v1928 = vlaneseq
        %v1929 = vshrl.u32 %v1928, 7
        %v1930 = vsub.s32 %v1927, %v1929
        %v1931 = vrot.slane %v1923, %v1930
        %v1933 = vunpack.c.l.s4 1934713408
        %v1934 = vunpack.c.0.s8 %v1933
        %v1935 = vlaneseq
        %v1936 = vshrl.u32 %v1935, 7
        %v1937 = vsub.s32 %v1934, %v1936
        %v1938 = vrot.slane %v1924, %v1937
        %v1939 = vcombine.high %v1915, 0.0
        %v1940 = vcombine.high %v1922, 0.0
        %v1941 = vcombine.high %v1931, 0.0
        %v1942 = vcombine.high %v1938, 0.0
        %v1943 = vcombine.low %v1915, %v1922
        %v1945 = vunpack.c.l.s4 1983009808
        %v1946 = vunpack.c.0.s8 %v1945
        %v1947 = vlaneseq
        %v1948 = vshrl.u32 %v1947, 7
        %v1949 = vsub.s32 %v1946, %v1948
        %v1950 = vrot.slane %v1943, %v1949
        %v1951 = vcombine.low %v1939, %v1940
        %v1953 = vunpack.c.l.s4 1983009808
        %v1954 = vunpack.c.0.s8 %v1953
        %v1955 = vlaneseq
        %v1956 = vshrl.u32 %v1955, 7
        %v1957 = vsub.s32 %v1954, %v1956
        %v1958 = vrot.slane %v1951, %v1957
        %v1959 = vcombine.low %v1931, %v1938
        %v1961 = vunpack.c.l.s4 1983009808
        %v1962 = vunpack.c.0.s8 %v1961
        %v1963 = vlaneseq
        %v1964 = vshrl.u32 %v1963, 7
        %v1965 = vsub.s32 %v1962, %v1964
        %v1966 = vrot.slane %v1959, %v1965
        %v1967 = vcombine.low %v1941, %v1942
        %v1969 = vunpack.c.l.s4 1983009808
        %v1970 = vunpack.c.0.s8 %v1969
        %v1971 = vlaneseq
        %v1972 = vshrl.u32 %v1971, 7
        %v1973 = vsub.s32 %v1970, %v1972
        %v1974 = vrot.slane %v1967, %v1973
        %v1975 = vcombine.low %v1950, %v1958
        %v1976 = vcombine.high %v1950, %v1958
        %v1978 = vunpack.c.l.s4 1934713408
        %v1979 = vunpack.c.0.s8 %v1978
        %v1980 = vlaneseq
        %v1981 = vshrl.u32 %v1980, 7
        %v1982 = vsub.s32 %v1979, %v1981
        %v1983 = vrot.slane %v1975, %v1982
        %v1985 = vunpack.c.l.s4 1934713408
        %v1986 = vunpack.c.0.s8 %v1985
        %v1987 = vlaneseq
        %v1988 = vshrl.u32 %v1987, 7
        %v1989 = vsub.s32 %v1986, %v1988
        %v1990 = vrot.slane %v1976, %v1989
        %v1991 = vcombine.low %v1966, %v1974
        %v1992 = vcombine.high %v1966, %v1974
        %v1994 = vunpack.c.l.s4 1934713408
        %v1995 = vunpack.c.0.s8 %v1994
        %v1996 = vlaneseq
        %v1997 = vshrl.u32 %v1996, 7
        %v1998 = vsub.s32 %v1995, %v1997
        %v1999 = vrot.slane %v1991, %v1998
        %v2001 = vunpack.c.l.s4 1934713408
        %v2002 = vunpack.c.0.s8 %v2001
        %v2003 = vlaneseq
        %v2004 = vshrl.u32 %v2003, 7
        %v2005 = vsub.s32 %v2002, %v2004
        %v2006 = vrot.slane %v1992, %v2005
        %v2007 = vcombine.low %v1983, %v1999
        %v2008 = vcombine.high %v1983, %v1999
        %v2009 = vcombine.low %v1990, %v2006
        %v2010 = vcombine.high %v1990, %v2006
        %2012 = vrot.lane.b32.xlu0 %v2008, 8
        %v2013 = vpop.permute.xlu0 %2012
        %2016 = vrot.lane.b32.xlu0 %v2009, 16
        %v2017 = vpop.permute.xlu0 %2016
        %2020 = vrot.lane.b32.xlu0 %v2010, 24
        %v2021 = vpop.permute.xlu0 %2020
        %v2023 = vsel %vm1230, %v2007, %v2013
        %vm2024 = vcmask 130048
        %v2025 = vsel %vm2024, %v2023, %v2017
        %vm2026 = vcmask 195584
        %v2027 = vsel %vm2026, %v2025, %v2021
        %v2029 = vlaneseq
        %v2030 = vshrl.u32 %v2029, 7
        %v2031 = vsub.s32 0, %v2030
        %v2032 = vrot.slane %v791, %v2031
        %v2035 = vsel %vm545, %v2027, 0
        %2037 = vmatprep.subr.mxu0 0.0
        %2038 = vmatpush1.msra.mxu0 0.0
        %2039 = vmatprep.subr.mxu0 0.0
        %2040 = vmatpush1.msra.mxu0 0.0
        %2041 = vmatprep.subr.mxu0 0.0
        %2042 = vmatpush1.msra.mxu0 0.0
        %2043 = vmatprep.subr.mxu0 0.0
        %2044 = vmatpush1.msra.mxu0 0.0
        %2045 = vmatprep.subr.mxu0 0.0
        %2046 = vmatpush1.msra.mxu0 0.0
        %2047 = vmatprep.subr.mxu0 0.0
        %2048 = vmatpush1.msra.mxu0 0.0
        %2049 = vmatprep.subr.mxu0 0.0
        %2050 = vmatpush1.msra.mxu0 0.0
        %2051 = vmatprep.subr.mxu0 0.0
        %2052 = vmatpush1.msra.mxu0 0.0
        %2053 = vmatprep.subr.mxu0 0.0
        %2054 = vmatpush1.msra.mxu0 0.0
        %2055 = vmatprep.subr.mxu0 0.0
        %2056 = vmatpush1.msra.mxu0 0.0
        %2057 = vmatprep.subr.mxu0 0.0
        %2058 = vmatpush1.msra.mxu0 0.0
        %2059 = vmatprep.subr.mxu0 0.0
        %2060 = vmatpush1.msra.mxu0 0.0
        %2061 = vmatprep.subr.mxu0 0.0
        %2062 = vmatpush1.msra.mxu0 %v790
        %2063 = vmatprep.subr.mxu0 0.0
        %2064 = vmatpush1.msra.mxu0 %v789
        %2065 = vmatprep.subr.mxu0 0.0
        %2066 = vmatpush1.msra.mxu0 %v788
        %2067 = vmatprep.subr.mxu0 0.0
        %2068 = vmatpush1.msra.mxu0 %v787
        %2069 = vmatprep.subr.mxu0 0.0
        %2070 = vmatpush2.msra.mxu0 0.0
        %2071 = vmatprep.subr.mxu0 0.0
        %2072 = vmatpush2.msra.mxu0 0.0
        %2073 = vmatprep.subr.mxu0 0.0
        %2074 = vmatpush2.msra.mxu0 0.0
        %2075 = vmatprep.subr.mxu0 0.0
        %2076 = vmatpush2.msra.mxu0 0.0
        %2077 = vmatprep.subr.mxu0 0.0
        %2078 = vmatpush2.msra.mxu0 0.0
        %2079 = vmatprep.subr.mxu0 0.0
        %2080 = vmatpush2.msra.mxu0 0.0
        %2081 = vmatprep.subr.mxu0 0.0
        %2082 = vmatpush2.msra.mxu0 0.0
        %2083 = vmatprep.subr.mxu0 0.0
        %2084 = vmatpush2.msra.mxu0 0.0
        %2085 = vmatprep.subr.mxu0 0.0
        %2086 = vmatpush2.msra.mxu0 0.0
        %2087 = vmatprep.subr.mxu0 0.0
        %2088 = vmatpush2.msra.mxu0 0.0
        %2089 = vmatprep.subr.mxu0 0.0
        %2090 = vmatpush2.msra.mxu0 0.0
        %2091 = vmatprep.subr.mxu0 0.0
        %2092 = vmatpush2.msra.mxu0 0.0
        %2093 = vmatprep.subr.mxu0 0.0
        %2094 = vmatpush2.msra.mxu0 0.0
        %2095 = vmatprep.subr.mxu0 0.0
        %2096 = vmatpush2.msra.mxu0 0.0
        %2097 = vmatprep.subr.mxu0 0.0
        %2098 = vmatpush2.msra.mxu0 0.0
        %2099 = vmatprep.subr.mxu0 0.0
        %2100 = vmatpush2.msra.mxu0 0.0
        %2101 = vmatprep.mubr.f32.mxu0 0.0
        %2102 = vmatmul.mubr.f32.gmra.mxu0 %v2035
        %v2103 = vpop.f32.mrf.mxu0
        %v2104 = vadd.f32 %v2032, %v2103
        %v2105 = vpop.f32.mrf.mxu0
        %2106 = vdwg.mxu0
        %2107 = vst.msk [vmem:[%s530] sm:$0xff] %vm545, %v2104
        %s2108 = sand.u32 %s287, 1
        %s2109 = scalar_lea.sflag [#allocation4], %s2108
        %s2110 = sand.u32 %s287, 1
        %s2111 = smul.addr %s2110, 8
        %s2112 = scalar_lea.vmem [#allocation14], %s2111
        // Predicated region
        $region93: #{tpu_custom_call.1} parent=63 // pred_check
          %p2113 = pneg %p297
        $region94: #{tpu_custom_call.1} parent=63 // pred_check_branch
          %2115 = sbr.rel (%p2113) target = $region96
        $region95: #{tpu_custom_call.1} parent=63 // pred_region
          %s2117 = ssub.s32 128, 128
          %2118 = vsyncadd %s2109, %s2117
          %s2119 = smul.addr %s33, 128
          %s2120 = scalar_lea.hbm %s11, %s2119
          %s2122 = sshll.u32 %s2112, 4
          %s2123 = int_to_ptr.vmem [resolvable:$true] %s2122
          %2125 = dma.vmem_to_hbm [thread:$0]  %s2123, 128, %s2120, %s2109
        $region96: #{tpu_custom_call.1} parent=63 // pred_fallthru
          _
      $region64: #{tpu_custom_call.1} parent=5 // pred_fallthru
        _
      %p2126 = scmp.le.s32.totalorder 2, %s28
      // Predicated region
      $region97: #{tpu_custom_call.1} parent=5 // pred_check
        %p2127 = pneg %p2126
      $region98: #{tpu_custom_call.1} parent=5 // pred_check_branch
        %2129 = sbr.rel (%p2127) target = $region100
      $region99: #{tpu_custom_call.1} parent=5 // pred_region
        %s2130 = ssub.s32 %s28, 2
        // Predicated region
        $region101: #{tpu_custom_call.1} parent=99 // pred_check
          %p2131 = pneg %p303
        $region102: #{tpu_custom_call.1} parent=99 // pred_check_branch
          %2133 = sbr.rel (%p2131) target = $region104
        $region103: #{tpu_custom_call.1} parent=99 // pred_region
          %s2134 = sand.u32 %s288, 1
          %s2135 = scalar_lea.sflag [#allocation4], %s2134
          %s2136 = sand.u32 %s288, 1
          %s2137 = smul.addr %s2136, 8
          %s2138 = scalar_lea.vmem [#allocation14], %s2137
          %2139 = dma.done %s2135, 128
        $region104: #{tpu_custom_call.1} parent=99 // pred_fallthru
          _
      $region100: #{tpu_custom_call.1} parent=5 // pred_fallthru
        _
    $region6: #{tpu_custom_call.1} parent=1 // loop_footer
      %s32 = sadd.s32 1, %s28
    $region7: #{tpu_custom_call.1} parent=1 // loop_footer_branch
      %27 = sbr.rel target = $region3
    $region8: #{tpu_custom_call.1} parent=1 // loop_exit
      _
    %2140 = vsyncpa [#allocation3], 1
    %s2141 = scalar_lea.sflag [#allocation3], 1
    %2142 = vsyncpa %s2141, 1
    %2143 = vsyncpa [#allocation6], 1
    %s2144 = scalar_lea.sflag [#allocation6], 1
    %2145 = vsyncpa %s2144, 1
    %2146 = vsyncpa [#allocation9], 1
    %2147 = vsyncpa [#allocation12], 1
    %2148 = vsyncpa [#allocation4], 1
    %s2149 = scalar_lea.sflag [#allocation4], 1
    %2150 = vsyncpa %s2149, 1

</llo_original>
